<compile_context>
chip_gen: v6e
topology: v6e:2x2x1
jax: 0.10.0
libtpu: 0.0.40
codegen_flags: <defaults>
</compile_context>

<pallas_src>
import functools

import jax
import jax.numpy as jnp
from jax.experimental import pallas as pl
from jax.experimental.pallas import tpu as pltpu


HIDDEN = 512
OUT = 4
LANES = 128       # fc3's 4-wide output is padded to one full lane group
ROW_ALIGN = 16    # bf16 packs 16 rows per sublane group


def _round_up(x, m):
    return (x + m - 1) // m * m


def _cdiv(a, b):
    return (a + b - 1) // b


def _device_defaults():
    """(default block_rows, tensorcores per chip) for the local TPU."""
    try:
        kind = jax.devices()[0].device_kind.lower()
    except Exception:  # pragma: no cover - defensive
        return 256, 1
    if "v5 lite" in kind or "v5e" in kind or "v5litepod" in kind:
        return 128, 1   # 4x128^2 MXU; weight stream dominates at low HBM BW
    if "v6" in kind:
        return 512, 1   # 128 MiB VMEM; bigger tiles amortize per-step overhead
    if "v7" in kind:
        return 256, 2   # 64 MiB VMEM (32 MiB scoped/core); 2 TCs (megacore)
    return 256, 1


def _mlp_kernel(x_ref, w1_ref, b1_ref, w2_ref, b2_ref, w3_ref, b3_ref, o_ref):
    # bf16 operands into the MXU, f32 accumulation (preferred_element_type);
    # bias add + ReLU stay in f32 (v5e's VPU has no bf16 ALU path).
    x = x_ref[...].astype(jnp.bfloat16)
    h1 = jnp.dot(x, w1_ref[...], preferred_element_type=jnp.float32) + b1_ref[...]
    h1 = jnp.maximum(h1, 0.0).astype(jnp.bfloat16)
    h2 = jnp.dot(h1, w2_ref[...], preferred_element_type=jnp.float32) + b2_ref[...]
    h2 = jnp.maximum(h2, 0.0).astype(jnp.bfloat16)
    out = jnp.dot(h2, w3_ref[...], preferred_element_type=jnp.float32) + b3_ref[...]
    o_ref[...] = out.astype(o_ref.dtype)


@functools.partial(jax.jit,
                   static_argnames=("out_features", "block_rows", "out_dtype"))
def neural_net_forward(x, params, *, out_features=OUT, block_rows=None,
                       out_dtype=jnp.float32):
    """x: [B, input_size] float32.

    params (from init_params): w1 [D,512] bf16, w2 [512,512] bf16,
    w3 [512,128] bf16 (lane-padded), b1/b2 [1,512] f32, b3 [1,128] f32
    (lane-padded).  Weights are stored transposed vs PyTorch's [out,in] so the
    kernel computes x @ W + b directly.
    """
    B, D = x.shape
    w1, b1 = params["w1"], params["b1"]
    w2, b2 = params["w2"], params["b2"]
    w3, b3 = params["w3"], params["b3"]     # pre-cast / pre-padded at init time
    H = w1.shape[1]
    o_pad = w3.shape[1]

    default_rows, num_cores = _device_defaults()
    if block_rows is None:
        block_rows = default_rows
    block_rows = max(ROW_ALIGN, _round_up(block_rows, ROW_ALIGN))

    b_aligned = _round_up(B, ROW_ALIGN)
    block_b = min(block_rows, b_aligned)
    # Megacore (v7x): guarantee >= num_cores batch tiles whenever the batch can
    # support one 16-row tile per core, so the "parallel" axis uses both TCs.
    if num_cores > 1 and b_aligned >= num_cores * ROW_ALIGN:
        block_b = min(block_b, _round_up(_cdiv(b_aligned, num_cores), ROW_ALIGN))

    grid = (_cdiv(B, block_b),)   # no wrapper-side pad; last tile is masked

    cost = pl.CostEstimate(
        flops=2 * B * (D * H + H * H + H * o_pad),
        transcendentals=0,
        bytes_accessed=(
            B * D * x.dtype.itemsize                        # activations in
            + (D * H + H * H + H * o_pad) * 2               # bf16 weights (once)
            + (2 * H + o_pad) * 4                           # f32 biases
            + B * o_pad * jnp.dtype(out_dtype).itemsize     # padded output
        ),
    )

    out = pl.pallas_call(
        _mlp_kernel,
        out_shape=jax.ShapeDtypeStruct((B, o_pad), out_dtype),
        grid_spec=pltpu.PrefetchScalarGridSpec(
            num_scalar_prefetch=0,
            grid=grid,
            in_specs=[
                pl.BlockSpec((block_b, D), lambda i: (i, 0)),  # x batch tile
                pl.BlockSpec((D, H), lambda i: (0, 0)),        # w1 (grid-invariant)
                pl.BlockSpec((1, H), lambda i: (0, 0)),        # b1
                pl.BlockSpec((H, H), lambda i: (0, 0)),        # w2 (grid-invariant)
                pl.BlockSpec((1, H), lambda i: (0, 0)),        # b2
                pl.BlockSpec((H, o_pad), lambda i: (0, 0)),    # w3 (lane-padded)
                pl.BlockSpec((1, o_pad), lambda i: (0, 0)),    # b3 (lane-padded)
            ],
            out_specs=pl.BlockSpec((block_b, o_pad), lambda i: (i, 0)),
        ),
        compiler_params=pltpu.CompilerParams(
            dimension_semantics=("parallel",)),
        cost_estimate=cost,
    )(x, w1, b1, w2, b2, w3, b3)

    return out[:, :out_features]


def forward_frames(frames, params, **kwargs):
    """Stack several frames into ONE pallas_call.

    The per-frame cost of this MLP is dominated by re-streaming ~0.9 MiB of
    bf16 weights plus launch overhead, so amortizing them across frames is the
    order-of-magnitude latency lever for serving.
    """
    x = jnp.stack([jnp.ravel(f) for f in frames], axis=0)
    return neural_net_forward(x, params, **kwargs)


def init_params(key, input_size, hidden=HIDDEN, out=OUT):
    """PyTorch nn.Linear-style uniform init.

    Weights are stored transposed ([in, out]) and pre-cast to bfloat16, and
    fc3's weight/bias are pre-padded to a full 128-lane group, so the per-call
    wrapper does no pad/astype work.  Biases stay float32 ([1, out]).
    """
    ks = jax.random.split(key, 6)

    def linear(kw, kb, fan_in, fan_out, pad_to=None):
        bound = float(fan_in) ** -0.5
        w_t = jax.random.uniform(kw, (fan_in, fan_out), jnp.float32, -bound, bound)
        b = jax.random.uniform(kb, (1, fan_out), jnp.float32, -bound, bound)
        if pad_to is not None and pad_to > fan_out:
            w_t = jnp.pad(w_t, ((0, 0), (0, pad_to - fan_out)))
            b = jnp.pad(b, ((0, 0), (0, pad_to - fan_out)))
        return w_t.astype(jnp.bfloat16), b

    w1, b1 = linear(ks[0], ks[1], input_size, hidden)
    w2, b2 = linear(ks[2], ks[3], hidden, hidden)
    w3, b3 = linear(ks[4], ks[5], hidden, out, pad_to=_round_up(out, LANES))
    return {"w1": w1, "b1": b1, "w2": w2, "b2": b2, "w3": w3, "b3": b3}


def _reference(x, p, out_features=OUT):
    """Pure-JAX reference with the same bf16-weight / f32-accumulate recipe."""
    h1 = jnp.dot(x.astype(jnp.bfloat16), p["w1"],
                 preferred_element_type=jnp.float32) + p["b1"]
    h1 = jnp.maximum(h1, 0.0)
    h2 = jnp.dot(h1.astype(jnp.bfloat16), p["w2"],
                 preferred_element_type=jnp.float32) + p["b2"]
    h2 = jnp.maximum(h2, 0.0)
    out = jnp.dot(h2.astype(jnp.bfloat16), p["w3"],
                  preferred_element_type=jnp.float32) + p["b3"]
    return out[:, :out_features]


if __name__ == "__main__":
    key = jax.random.PRNGKey(0)
    k_x, k_p = jax.random.split(key)

    input_size = 256  # small flattened webcam feature vector
    params = init_params(k_p, input_size)

    # (1) Default path: one batched call (device-appropriate tile height).
    batch = 16
    x = jax.random.normal(k_x, (batch, input_size), jnp.float32)
    out = jax.block_until_ready(neural_net_forward(x, params))
    assert out.shape == (batch, OUT), out.shape
    assert jnp.allclose(out, _reference(x, params), atol=2e-3, rtol=2e-3), \
        "mismatch vs reference (default)"

    # (2) Multi-tile grid: exercises the parallel batch axis / megacore split.
    batch2 = 48
    x2 = jax.random.normal(jax.random.PRNGKey(1), (batch2, input_size), jnp.float32)
    out2 = jax.block_until_ready(neural_net_forward(x2, params, block_rows=16))
    assert out2.shape == (batch2, OUT), out2.shape
    assert jnp.allclose(out2, _reference(x2, params), atol=2e-3, rtol=2e-3), \
        "mismatch vs reference (multi-tile)"

    # (3) Ragged batch (B % block_b != 0): no wrapper-side pad; Pallas masks
    #     the last tile's store.
    batch3 = 40
    x3 = jax.random.normal(jax.random.PRNGKey(2), (batch3, input_size), jnp.float32)
    out3 = jax.block_until_ready(neural_net_forward(x3, params, block_rows=16))
    assert out3.shape == (batch3, OUT), out3.shape
    assert jnp.allclose(out3, _reference(x3, params), atol=2e-3, rtol=2e-3), \
        "mismatch vs reference (ragged)"

    # (4) Frame-batched serving helper: several single frames -> one call,
    #     amortizing the weight stream + launch overhead.
    frames = [jax.random.normal(jax.random.PRNGKey(10 + i), (input_size,), jnp.float32)
              for i in range(3)]
    out4 = jax.block_until_ready(forward_frames(frames, params))
    assert out4.shape == (3, OUT), out4.shape
    assert jnp.allclose(out4, _reference(jnp.stack(frames), params),
                        atol=2e-3, rtol=2e-3), "mismatch vs reference (frames)"

    print("KERNEL_OK")
</pallas_src>

<mosaic_0001>
module attributes {stable_mosaic.version = 11 : i64} {
  func.func @_mlp_kernel(%arg0: i32, %arg1: memref<16x256xf32, #tpu.memory_space<vmem>>, %arg2: memref<256x512xbf16, #tpu.memory_space<vmem>>, %arg3: memref<1x512xf32, #tpu.memory_space<vmem>>, %arg4: memref<512x512xbf16, #tpu.memory_space<vmem>>, %arg5: memref<1x512xf32, #tpu.memory_space<vmem>>, %arg6: memref<512x128xbf16, #tpu.memory_space<vmem>>, %arg7: memref<1x128xf32, #tpu.memory_space<vmem>>, %arg8: memref<16x128xf32, #tpu.memory_space<vmem>>) attributes {dimension_semantics = [#tpu.dimension_semantics<parallel>], iteration_bounds = array<i64: 1>, scalar_prefetch = 0 : i64, scratch_operands = 0 : i64, tpu.core_type = #tpu.core_type<tc>, window_params = [{transform_indices = @transform_0, window_bounds = array<i64: 16, 256>}, {pipeline_mode = #tpu.pipeline_mode<synchronous>, transform_indices = @transform_1, window_bounds = array<i64: 256, 512>}, {pipeline_mode = #tpu.pipeline_mode<synchronous>, transform_indices = @transform_2, window_bounds = array<i64: 1, 512>}, {pipeline_mode = #tpu.pipeline_mode<synchronous>, transform_indices = @transform_3, window_bounds = array<i64: 512, 512>}, {pipeline_mode = #tpu.pipeline_mode<synchronous>, transform_indices = @transform_4, window_bounds = array<i64: 1, 512>}, {pipeline_mode = #tpu.pipeline_mode<synchronous>, transform_indices = @transform_5, window_bounds = array<i64: 512, 128>}, {pipeline_mode = #tpu.pipeline_mode<synchronous>, transform_indices = @transform_6, window_bounds = array<i64: 1, 128>}, {transform_indices = @transform_7, window_bounds = array<i64: 16, 128>}]} {
    %c0 = arith.constant 0 : index
    %c0_0 = arith.constant 0 : index
    %0 = vector.load %arg1[%c0, %c0_0] : memref<16x256xf32, #tpu.memory_space<vmem>>, vector<16x256xf32>
    %1 = arith.truncf %0 : vector<16x256xf32> to vector<16x256xbf16>
    %c0_1 = arith.constant 0 : index
    %c0_2 = arith.constant 0 : index
    %2 = vector.load %arg2[%c0_1, %c0_2] : memref<256x512xbf16, #tpu.memory_space<vmem>>, vector<256x512xbf16>
    %cst = arith.constant dense<0.000000e+00> : vector<16x512xf32>
    %3 = tpu.matmul %1, %2, %cst {dimension_numbers = #tpu.dot_dimension_numbers<[1], [0], [0], [1], [0, 0, 1, 1], [], []>} : vector<16x256xbf16>, vector<256x512xbf16>, vector<16x512xf32> -> vector<16x512xf32>
    %c0_3 = arith.constant 0 : index
    %c0_4 = arith.constant 0 : index
    %4 = vector.load %arg3[%c0_3, %c0_4] : memref<1x512xf32, #tpu.memory_space<vmem>>, vector<1x512xf32>
    %5 = vector.broadcast %4 : vector<1x512xf32> to vector<16x512xf32>
    %6 = arith.addf %3, %5 : vector<16x512xf32>
    %cst_5 = arith.constant 0.000000e+00 : f32
    %7 = vector.broadcast %cst_5 : f32 to vector<16x512xf32>
    %8 = arith.maximumf %6, %7 : vector<16x512xf32>
    %9 = arith.truncf %8 : vector<16x512xf32> to vector<16x512xbf16>
    %c0_6 = arith.constant 0 : index
    %c0_7 = arith.constant 0 : index
    %10 = vector.load %arg4[%c0_6, %c0_7] : memref<512x512xbf16, #tpu.memory_space<vmem>>, vector<512x512xbf16>
    %cst_8 = arith.constant dense<0.000000e+00> : vector<16x512xf32>
    %11 = tpu.matmul %9, %10, %cst_8 {dimension_numbers = #tpu.dot_dimension_numbers<[1], [0], [0], [1], [0, 0, 1, 1], [], []>} : vector<16x512xbf16>, vector<512x512xbf16>, vector<16x512xf32> -> vector<16x512xf32>
    %c0_9 = arith.constant 0 : index
    %c0_10 = arith.constant 0 : index
    %12 = vector.load %arg5[%c0_9, %c0_10] : memref<1x512xf32, #tpu.memory_space<vmem>>, vector<1x512xf32>
    %13 = vector.broadcast %12 : vector<1x512xf32> to vector<16x512xf32>
    %14 = arith.addf %11, %13 : vector<16x512xf32>
    %cst_11 = arith.constant 0.000000e+00 : f32
    %15 = vector.broadcast %cst_11 : f32 to vector<16x512xf32>
    %16 = arith.maximumf %14, %15 : vector<16x512xf32>
    %17 = arith.truncf %16 : vector<16x512xf32> to vector<16x512xbf16>
    %c0_12 = arith.constant 0 : index
    %c0_13 = arith.constant 0 : index
    %18 = vector.load %arg6[%c0_12, %c0_13] : memref<512x128xbf16, #tpu.memory_space<vmem>>, vector<512x128xbf16>
    %cst_14 = arith.constant dense<0.000000e+00> : vector<16x128xf32>
    %19 = tpu.matmul %17, %18, %cst_14 {dimension_numbers = #tpu.dot_dimension_numbers<[1], [0], [0], [1], [0, 0, 1, 1], [], []>} : vector<16x512xbf16>, vector<512x128xbf16>, vector<16x128xf32> -> vector<16x128xf32>
    %c0_15 = arith.constant 0 : index
    %c0_16 = arith.constant 0 : index
    %20 = vector.load %arg7[%c0_15, %c0_16] : memref<1x128xf32, #tpu.memory_space<vmem>>, vector<1x128xf32>
    %21 = vector.broadcast %20 : vector<1x128xf32> to vector<16x128xf32>
    %22 = arith.addf %19, %21 : vector<16x128xf32>
    %c0_17 = arith.constant 0 : index
    %c0_18 = arith.constant 0 : index
    %23 = vector.load %arg8[%c0_17, %c0_18] : memref<16x128xf32, #tpu.memory_space<vmem>>, vector<16x128xf32>
    tpu.vector_store %arg8[%c0_17, %c0_18], %22 {strides = array<i32>} : memref<16x128xf32, #tpu.memory_space<vmem>>, vector<16x128xf32>,
    return
  }
  func.func @transform_0(%arg0: i32) -> (i32, i32) {
    %c0_i32 = arith.constant 0 : i32
    %c0_i32_0 = arith.constant 0 : i32
    return %arg0, %c0_i32 : i32, i32
  }
  func.func @transform_1(%arg0: i32) -> (i32, i32) {
    %c0_i32 = arith.constant 0 : i32
    %c0_i32_0 = arith.constant 0 : i32
    %c0_i32_1 = arith.constant 0 : i32
    return %c0_i32, %c0_i32_0 : i32, i32
  }
  func.func @transform_2(%arg0: i32) -> (i32, i32) {
    %c0_i32 = arith.constant 0 : i32
    %c0_i32_0 = arith.constant 0 : i32
    %c0_i32_1 = arith.constant 0 : i32
    return %c0_i32, %c0_i32_0 : i32, i32
  }
  func.func @transform_3(%arg0: i32) -> (i32, i32) {
    %c0_i32 = arith.constant 0 : i32
    %c0_i32_0 = arith.constant 0 : i32
    %c0_i32_1 = arith.constant 0 : i32
    return %c0_i32, %c0_i32_0 : i32, i32
  }
  func.func @transform_4(%arg0: i32) -> (i32, i32) {
    %c0_i32 = arith.constant 0 : i32
    %c0_i32_0 = arith.constant 0 : i32
    %c0_i32_1 = arith.constant 0 : i32
    return %c0_i32, %c0_i32_0 : i32, i32
  }
  func.func @transform_5(%arg0: i32) -> (i32, i32) {
    %c0_i32 = arith.constant 0 : i32
    %c0_i32_0 = arith.constant 0 : i32
    %c0_i32_1 = arith.constant 0 : i32
    return %c0_i32, %c0_i32_0 : i32, i32
  }
  func.func @transform_6(%arg0: i32) -> (i32, i32) {
    %c0_i32 = arith.constant 0 : i32
    %c0_i32_0 = arith.constant 0 : i32
    %c0_i32_1 = arith.constant 0 : i32
    return %c0_i32, %c0_i32_0 : i32, i32
  }
  func.func @transform_7(%arg0: i32) -> (i32, i32) {
    %c0_i32 = arith.constant 0 : i32
    %c0_i32_0 = arith.constant 0 : i32
    return %arg0, %c0_i32 : i32, i32
  }
}

</mosaic_0001>

<llo_original>
// kernel: neural_net_forward.1
$region0: #{neural_net_forward.1}
  #allocation0 [shape = 'u32[]', space=smem, size = 0x4, offset = 0x4, fixed_abs, tag = 'smem constant byte address 0x4 - core index']
  #allocation1 [shape = 'u32[144,128]{1,0:T(1,128)}', space=vmem, size = 0x12000, scoped, tag = 'internal scratch']
  %s0 = inlined_call_operand.hbm [shape: f32[16,256], index: 0, kind: input, shape index: {}]
  %s1 = inlined_call_operand.hbm [shape: bf16[256,512], index: 1, kind: input, shape index: {}]
  %s2 = inlined_call_operand.hbm [shape: f32[1,512], index: 2, kind: input, shape index: {}]
  %s3 = inlined_call_operand.hbm [shape: bf16[512,512], index: 3, kind: input, shape index: {}]
  %s4 = inlined_call_operand.hbm [shape: f32[1,512], index: 4, kind: input, shape index: {}]
  %s5 = inlined_call_operand.hbm [shape: bf16[512,128], index: 5, kind: input, shape index: {}]
  %s6 = inlined_call_operand.vmem [shape: f32[1,128], index: 6, kind: input, shape index: {}]
  %s7 = inlined_call_operand.vmem [shape: f32[16,128], index: 7, kind: output, shape index: {}]
  %s8 = sld [smem:[#allocation0]]
  $region62: #{neural_net_forward.1} parent=0
    _
  %s10 = ssub.s32 1, %s8
  %s11 = scalar_select 0, %s10, %s8
  $region1: #{neural_net_forward.1} parent=0
    #allocation2 [shape = 'u8[16384]{0}', space=vmem, size = 0x4000, scoped, tag = 'input window, operand 0, single buffered']
    #allocation3 [shape = 's32[1]{0}', space=sflag, size = 0x4, scoped, tag = 'scoped memory for neural_net_forward.1']
    #allocation4 [shape = 'u8[262144]{0}', space=vmem, size = 0x40000, scoped, tag = 'input window, operand 1, single buffered']
    #allocation5 [shape = 's32[1]{0}', space=sflag, size = 0x4, scoped, tag = 'scoped memory for neural_net_forward.1']
    #allocation6 [shape = 'u8[2048]{0}', space=vmem, size = 0x800, scoped, tag = 'input window, operand 2, single buffered']
    #allocation7 [shape = 'u8[524288]{0}', space=vmem, size = 0x80000, scoped, tag = 'input window, operand 3, single buffered']
    #allocation8 [shape = 's32[1]{0}', space=sflag, size = 0x4, scoped, tag = 'scoped memory for neural_net_forward.1']
    #allocation9 [shape = 'u8[2048]{0}', space=vmem, size = 0x800, scoped, tag = 'input window, operand 4, single buffered']
    #allocation10 [shape = 'u8[131072]{0}', space=vmem, size = 0x20000, scoped, tag = 'input window, operand 5, single buffered']
    #allocation11 [shape = 's32[1]{0}', space=sflag, size = 0x4, scoped, tag = 'scoped memory for neural_net_forward.1']
    %12 = vsyncpa [#allocation3], 0
    %13 = vsyncpa [#allocation5], 0
    %14 = vsyncpa [#allocation8], 0
    %15 = vsyncpa [#allocation11], 0
    // Predicated region
    $region2: #{neural_net_forward.1} parent=1 // pred_check
      _
    $region3: #{neural_net_forward.1} parent=1 // pred_check_branch
      %17 = sbr.rel (0) target = $region5
    $region4: #{neural_net_forward.1} parent=1 // pred_region
      %s19 = ssub.s32 512, 512
      %20 = vsyncadd [#allocation3], %s19
      %s21 = sshll.u32 [#allocation2], 4
      %s22 = int_to_ptr.vmem [resolvable:$true] %s21
      %27 = dma.hbm_to_vmem [thread:$0]  %s0, 512, %s22, [#allocation3], 256, 256, 16
    $region5: #{neural_net_forward.1} parent=1 // pred_fallthru
      _
    // Predicated region
    $region6: #{neural_net_forward.1} parent=1 // pred_check
      _
    $region7: #{neural_net_forward.1} parent=1 // pred_check_branch
      %29 = sbr.rel (0) target = $region9
    $region8: #{neural_net_forward.1} parent=1 // pred_region
      %s31 = ssub.s32 8192, 8192
      %32 = vsyncadd [#allocation5], %s31
      %s33 = sshll.u32 [#allocation4], 4
      %s34 = int_to_ptr.vmem [resolvable:$true] %s33
      %39 = dma.hbm_to_vmem [thread:$0]  %s1, 8192, %s34, [#allocation5], 256, 256, 16
    $region9: #{neural_net_forward.1} parent=1 // pred_fallthru
      _
    // Predicated region
    $region10: #{neural_net_forward.1} parent=1 // pred_check
      _
    $region11: #{neural_net_forward.1} parent=1 // pred_check_branch
      %41 = sbr.rel (0) target = $region13
    $region12: #{neural_net_forward.1} parent=1 // pred_region
      %s43 = ssub.s32 64, 64
      %44 = vsyncadd [#allocation5], %s43
      %s46 = sshll.u32 [#allocation6], 4
      %s47 = int_to_ptr.vmem [resolvable:$true] %s46
      %49 = dma.hbm_to_vmem [thread:$0]  %s2, 64, %s47, [#allocation5]
    $region13: #{neural_net_forward.1} parent=1 // pred_fallthru
      _
    // Predicated region
    $region14: #{neural_net_forward.1} parent=1 // pred_check
      _
    $region15: #{neural_net_forward.1} parent=1 // pred_check_branch
      %51 = sbr.rel (0) target = $region17
    $region16: #{neural_net_forward.1} parent=1 // pred_region
      %s53 = ssub.s32 16384, 16384
      %54 = vsyncadd [#allocation8], %s53
      %s55 = sshll.u32 [#allocation7], 4
      %s56 = int_to_ptr.vmem [resolvable:$true] %s55
      %61 = dma.hbm_to_vmem [thread:$0]  %s3, 16384, %s56, [#allocation8], 256, 256, 16
    $region17: #{neural_net_forward.1} parent=1 // pred_fallthru
      _
    // Predicated region
    $region18: #{neural_net_forward.1} parent=1 // pred_check
      _
    $region19: #{neural_net_forward.1} parent=1 // pred_check_branch
      %63 = sbr.rel (0) target = $region21
    $region20: #{neural_net_forward.1} parent=1 // pred_region
      %s65 = ssub.s32 64, 64
      %66 = vsyncadd [#allocation8], %s65
      %s68 = sshll.u32 [#allocation9], 4
      %s69 = int_to_ptr.vmem [resolvable:$true] %s68
      %71 = dma.hbm_to_vmem [thread:$0]  %s4, 64, %s69, [#allocation8]
    $region21: #{neural_net_forward.1} parent=1 // pred_fallthru
      _
    // Predicated region
    $region22: #{neural_net_forward.1} parent=1 // pred_check
      _
    $region23: #{neural_net_forward.1} parent=1 // pred_check_branch
      %73 = sbr.rel (0) target = $region25
    $region24: #{neural_net_forward.1} parent=1 // pred_region
      %s75 = ssub.s32 4096, 4096
      %76 = vsyncadd [#allocation11], %s75
      %s77 = sshll.u32 [#allocation10], 4
      %s78 = int_to_ptr.vmem [resolvable:$true] %s77
      %83 = dma.hbm_to_vmem [thread:$0]  %s5, 4096, %s78, [#allocation11], 64, 64, 4
    $region25: #{neural_net_forward.1} parent=1 // pred_fallthru
      _
    // Predicated region
    $region26: #{neural_net_forward.1} parent=1 // pred_check
      _
    $region27: #{neural_net_forward.1} parent=1 // pred_check_branch
      %85 = sbr.rel (0) target = $region29
    $region28: #{neural_net_forward.1} parent=1 // pred_region
      _
    $region29: #{neural_net_forward.1} parent=1 // pred_fallthru
      _
    // Predicated region
    $region30: #{neural_net_forward.1} parent=1 // pred_check
      _
    $region31: #{neural_net_forward.1} parent=1 // pred_check_branch
      %87 = sbr.rel (0) target = $region33
    $region32: #{neural_net_forward.1} parent=1 // pred_region
      %88 = dma.done [#allocation3], 512
    $region33: #{neural_net_forward.1} parent=1 // pred_fallthru
      _
    // Predicated region
    $region34: #{neural_net_forward.1} parent=1 // pred_check
      _
    $region35: #{neural_net_forward.1} parent=1 // pred_check_branch
      %90 = sbr.rel (0) target = $region37
    $region36: #{neural_net_forward.1} parent=1 // pred_region
      %91 = dma.done [#allocation5], 8192
    $region37: #{neural_net_forward.1} parent=1 // pred_fallthru
      _
    // Predicated region
    $region38: #{neural_net_forward.1} parent=1 // pred_check
      _
    $region39: #{neural_net_forward.1} parent=1 // pred_check_branch
      %93 = sbr.rel (0) target = $region41
    $region40: #{neural_net_forward.1} parent=1 // pred_region
      %94 = dma.done [#allocation5], 64
    $region41: #{neural_net_forward.1} parent=1 // pred_fallthru
      _
    // Predicated region
    $region42: #{neural_net_forward.1} parent=1 // pred_check
      _
    $region43: #{neural_net_forward.1} parent=1 // pred_check_branch
      %96 = sbr.rel (0) target = $region45
    $region44: #{neural_net_forward.1} parent=1 // pred_region
      %97 = dma.done [#allocation8], 16384
    $region45: #{neural_net_forward.1} parent=1 // pred_fallthru
      _
    // Predicated region
    $region46: #{neural_net_forward.1} parent=1 // pred_check
      _
    $region47: #{neural_net_forward.1} parent=1 // pred_check_branch
      %99 = sbr.rel (0) target = $region49
    $region48: #{neural_net_forward.1} parent=1 // pred_region
      %100 = dma.done [#allocation8], 64
    $region49: #{neural_net_forward.1} parent=1 // pred_fallthru
      _
    // Predicated region
    $region50: #{neural_net_forward.1} parent=1 // pred_check
      _
    $region51: #{neural_net_forward.1} parent=1 // pred_check_branch
      %102 = sbr.rel (0) target = $region53
    $region52: #{neural_net_forward.1} parent=1 // pred_region
      %103 = dma.done [#allocation11], 4096
    $region53: #{neural_net_forward.1} parent=1 // pred_fallthru
      _
    %v105 = vld [vmem:[#allocation2] sm:$0xff]
    %v106 = vld [vmem:[#allocation2 + $0x8] sm:$0xff]
    %v107 = vld [vmem:[#allocation2 + $0x10] sm:$0xff]
    %v108 = vld [vmem:[#allocation2 + $0x18] sm:$0xff]
    %v109 = vpack.c.bf16 %v107, %v105
    %v110 = vpack.c.bf16 %v108, %v106
    %v111 = vld [vmem:[#allocation4] sm:$0xff]
    %v112 = vld [vmem:[#allocation4 + $0x8] sm:$0xff]
    %v113 = vld [vmem:[#allocation4 + $0x10] sm:$0xff]
    %v114 = vld [vmem:[#allocation4 + $0x18] sm:$0xff]
    %v115 = vld [vmem:[#allocation4 + $0x20] sm:$0xff]
    %v116 = vld [vmem:[#allocation4 + $0x28] sm:$0xff]
    %v117 = vld [vmem:[#allocation4 + $0x30] sm:$0xff]
    %v118 = vld [vmem:[#allocation4 + $0x38] sm:$0xff]
    %v119 = vld [vmem:[#allocation4 + $0x40] sm:$0xff]
    %v120 = vld [vmem:[#allocation4 + $0x48] sm:$0xff]
    %v121 = vld [vmem:[#allocation4 + $0x50] sm:$0xff]
    %v122 = vld [vmem:[#allocation4 + $0x58] sm:$0xff]
    %v123 = vld [vmem:[#allocation4 + $0x60] sm:$0xff]
    %v124 = vld [vmem:[#allocation4 + $0x68] sm:$0xff]
    %v125 = vld [vmem:[#allocation4 + $0x70] sm:$0xff]
    %v126 = vld [vmem:[#allocation4 + $0x78] sm:$0xff]
    %v127 = vld [vmem:[#allocation4 + $0x80] sm:$0xff]
    %v128 = vld [vmem:[#allocation4 + $0x88] sm:$0xff]
    %v129 = vld [vmem:[#allocation4 + $0x90] sm:$0xff]
    %v130 = vld [vmem:[#allocation4 + $0x98] sm:$0xff]
    %v131 = vld [vmem:[#allocation4 + $0xa0] sm:$0xff]
    %v132 = vld [vmem:[#allocation4 + $0xa8] sm:$0xff]
    %v133 = vld [vmem:[#allocation4 + $0xb0] sm:$0xff]
    %v134 = vld [vmem:[#allocation4 + $0xb8] sm:$0xff]
    %v135 = vld [vmem:[#allocation4 + $0xc0] sm:$0xff]
    %v136 = vld [vmem:[#allocation4 + $0xc8] sm:$0xff]
    %v137 = vld [vmem:[#allocation4 + $0xd0] sm:$0xff]
    %v138 = vld [vmem:[#allocation4 + $0xd8] sm:$0xff]
    %v139 = vld [vmem:[#allocation4 + $0xe0] sm:$0xff]
    %v140 = vld [vmem:[#allocation4 + $0xe8] sm:$0xff]
    %v141 = vld [vmem:[#allocation4 + $0xf0] sm:$0xff]
    %v142 = vld [vmem:[#allocation4 + $0xf8] sm:$0xff]
    %v143 = vld [vmem:[#allocation4 + $0x100] sm:$0xff]
    %v144 = vld [vmem:[#allocation4 + $0x108] sm:$0xff]
    %v145 = vld [vmem:[#allocation4 + $0x110] sm:$0xff]
    %v146 = vld [vmem:[#allocation4 + $0x118] sm:$0xff]
    %v147 = vld [vmem:[#allocation4 + $0x120] sm:$0xff]
    %v148 = vld [vmem:[#allocation4 + $0x128] sm:$0xff]
    %v149 = vld [vmem:[#allocation4 + $0x130] sm:$0xff]
    %v150 = vld [vmem:[#allocation4 + $0x138] sm:$0xff]
    %v151 = vld [vmem:[#allocation4 + $0x140] sm:$0xff]
    %v152 = vld [vmem:[#allocation4 + $0x148] sm:$0xff]
    %v153 = vld [vmem:[#allocation4 + $0x150] sm:$0xff]
    %v154 = vld [vmem:[#allocation4 + $0x158] sm:$0xff]
    %v155 = vld [vmem:[#allocation4 + $0x160] sm:$0xff]
    %v156 = vld [vmem:[#allocation4 + $0x168] sm:$0xff]
    %v157 = vld [vmem:[#allocation4 + $0x170] sm:$0xff]
    %v158 = vld [vmem:[#allocation4 + $0x178] sm:$0xff]
    %v159 = vld [vmem:[#allocation4 + $0x180] sm:$0xff]
    %v160 = vld [vmem:[#allocation4 + $0x188] sm:$0xff]
    %v161 = vld [vmem:[#allocation4 + $0x190] sm:$0xff]
    %v162 = vld [vmem:[#allocation4 + $0x198] sm:$0xff]
    %v163 = vld [vmem:[#allocation4 + $0x1a0] sm:$0xff]
    %v164 = vld [vmem:[#allocation4 + $0x1a8] sm:$0xff]
    %v165 = vld [vmem:[#allocation4 + $0x1b0] sm:$0xff]
    %v166 = vld [vmem:[#allocation4 + $0x1b8] sm:$0xff]
    %v167 = vld [vmem:[#allocation4 + $0x1c0] sm:$0xff]
    %v168 = vld [vmem:[#allocation4 + $0x1c8] sm:$0xff]
    %v169 = vld [vmem:[#allocation4 + $0x1d0] sm:$0xff]
    %v170 = vld [vmem:[#allocation4 + $0x1d8] sm:$0xff]
    %v171 = vld [vmem:[#allocation4 + $0x1e0] sm:$0xff]
    %v172 = vld [vmem:[#allocation4 + $0x1e8] sm:$0xff]
    %v173 = vld [vmem:[#allocation4 + $0x1f0] sm:$0xff]
    %v174 = vld [vmem:[#allocation4 + $0x1f8] sm:$0xff]
    %v175 = vld [vmem:[#allocation6] sm:$0xf]
    %v177 = vlaneseq
    %v178 = vshrl.u32 %v177, 7
    %v179 = vsub.s32 0, %v178
    %v180 = vrot.slane %v175, %v179
    %v181 = vlaneseq
    %v182 = vshrl.u32 %v181, 7
    %v183 = vsub.s32 1, %v182
    %v184 = vrot.slane %v175, %v183
    %v185 = vlaneseq
    %v186 = vshrl.u32 %v185, 7
    %v187 = vsub.s32 2, %v186
    %v188 = vrot.slane %v175, %v187
    %v189 = vlaneseq
    %v190 = vshrl.u32 %v189, 7
    %v191 = vsub.s32 3, %v190
    %v192 = vrot.slane %v175, %v191
    %v261 = vunpack.c.l.b16 %v111
    %v262 = vunpack.c.h.b16 %v111
    %v263 = vunpack.c.l.b16 %v112
    %v264 = vunpack.c.h.b16 %v112
    %v265 = vunpack.c.l.b16 %v113
    %v266 = vunpack.c.h.b16 %v113
    %v267 = vunpack.c.l.b16 %v114
    %v268 = vunpack.c.h.b16 %v114
    %v269 = vunpack.c.l.b16 %v115
    %v270 = vunpack.c.h.b16 %v115
    %v271 = vunpack.c.l.b16 %v116
    %v272 = vunpack.c.h.b16 %v116
    %v273 = vunpack.c.l.b16 %v117
    %v274 = vunpack.c.h.b16 %v117
    %v275 = vunpack.c.l.b16 %v118
    %v276 = vunpack.c.h.b16 %v118
    %v277 = vunpack.c.l.b16 %v119
    %v278 = vunpack.c.h.b16 %v119
    %v279 = vunpack.c.l.b16 %v120
    %v280 = vunpack.c.h.b16 %v120
    %v281 = vunpack.c.l.b16 %v121
    %v282 = vunpack.c.h.b16 %v121
    %v283 = vunpack.c.l.b16 %v122
    %v284 = vunpack.c.h.b16 %v122
    %v285 = vunpack.c.l.b16 %v123
    %v286 = vunpack.c.h.b16 %v123
    %v287 = vunpack.c.l.b16 %v124
    %v288 = vunpack.c.h.b16 %v124
    %v289 = vunpack.c.l.b16 %v125
    %v290 = vunpack.c.h.b16 %v125
    %v291 = vunpack.c.l.b16 %v126
    %v292 = vunpack.c.h.b16 %v126
    %v293 = vunpack.c.l.b16 %v127
    %v294 = vunpack.c.h.b16 %v127
    %v295 = vunpack.c.l.b16 %v128
    %v296 = vunpack.c.h.b16 %v128
    %v297 = vunpack.c.l.b16 %v129
    %v298 = vunpack.c.h.b16 %v129
    %v299 = vunpack.c.l.b16 %v130
    %v300 = vunpack.c.h.b16 %v130
    %v301 = vunpack.c.l.b16 %v131
    %v302 = vunpack.c.h.b16 %v131
    %v303 = vunpack.c.l.b16 %v132
    %v304 = vunpack.c.h.b16 %v132
    %v305 = vunpack.c.l.b16 %v133
    %v306 = vunpack.c.h.b16 %v133
    %v307 = vunpack.c.l.b16 %v134
    %v308 = vunpack.c.h.b16 %v134
    %v309 = vunpack.c.l.b16 %v135
    %v310 = vunpack.c.h.b16 %v135
    %v311 = vunpack.c.l.b16 %v136
    %v312 = vunpack.c.h.b16 %v136
    %v313 = vunpack.c.l.b16 %v137
    %v314 = vunpack.c.h.b16 %v137
    %v315 = vunpack.c.l.b16 %v138
    %v316 = vunpack.c.h.b16 %v138
    %v317 = vunpack.c.l.b16 %v139
    %v318 = vunpack.c.h.b16 %v139
    %v319 = vunpack.c.l.b16 %v140
    %v320 = vunpack.c.h.b16 %v140
    %v321 = vunpack.c.l.b16 %v141
    %v322 = vunpack.c.h.b16 %v141
    %v323 = vunpack.c.l.b16 %v142
    %v324 = vunpack.c.h.b16 %v142
    %v325 = vunpack.c.l.b16 %v143
    %v326 = vunpack.c.h.b16 %v143
    %v327 = vunpack.c.l.b16 %v144
    %v328 = vunpack.c.h.b16 %v144
    %v329 = vunpack.c.l.b16 %v145
    %v330 = vunpack.c.h.b16 %v145
    %v331 = vunpack.c.l.b16 %v146
    %v332 = vunpack.c.h.b16 %v146
    %v333 = vunpack.c.l.b16 %v147
    %v334 = vunpack.c.h.b16 %v147
    %v335 = vunpack.c.l.b16 %v148
    %v336 = vunpack.c.h.b16 %v148
    %v337 = vunpack.c.l.b16 %v149
    %v338 = vunpack.c.h.b16 %v149
    %v339 = vunpack.c.l.b16 %v150
    %v340 = vunpack.c.h.b16 %v150
    %v341 = vunpack.c.l.b16 %v151
    %v342 = vunpack.c.h.b16 %v151
    %v343 = vunpack.c.l.b16 %v152
    %v344 = vunpack.c.h.b16 %v152
    %v345 = vunpack.c.l.b16 %v153
    %v346 = vunpack.c.h.b16 %v153
    %v347 = vunpack.c.l.b16 %v154
    %v348 = vunpack.c.h.b16 %v154
    %v349 = vunpack.c.l.b16 %v155
    %v350 = vunpack.c.h.b16 %v155
    %v351 = vunpack.c.l.b16 %v156
    %v352 = vunpack.c.h.b16 %v156
    %v353 = vunpack.c.l.b16 %v157
    %v354 = vunpack.c.h.b16 %v157
    %v355 = vunpack.c.l.b16 %v158
    %v356 = vunpack.c.h.b16 %v158
    %v357 = vunpack.c.l.b16 %v159
    %v358 = vunpack.c.h.b16 %v159
    %v359 = vunpack.c.l.b16 %v160
    %v360 = vunpack.c.h.b16 %v160
    %v361 = vunpack.c.l.b16 %v161
    %v362 = vunpack.c.h.b16 %v161
    %v363 = vunpack.c.l.b16 %v162
    %v364 = vunpack.c.h.b16 %v162
    %v365 = vunpack.c.l.b16 %v163
    %v366 = vunpack.c.h.b16 %v163
    %v367 = vunpack.c.l.b16 %v164
    %v368 = vunpack.c.h.b16 %v164
    %v369 = vunpack.c.l.b16 %v165
    %v370 = vunpack.c.h.b16 %v165
    %v371 = vunpack.c.l.b16 %v166
    %v372 = vunpack.c.h.b16 %v166
    %v373 = vunpack.c.l.b16 %v167
    %v374 = vunpack.c.h.b16 %v167
    %v375 = vunpack.c.l.b16 %v168
    %v376 = vunpack.c.h.b16 %v168
    %v377 = vunpack.c.l.b16 %v169
    %v378 = vunpack.c.h.b16 %v169
    %v379 = vunpack.c.l.b16 %v170
    %v380 = vunpack.c.h.b16 %v170
    %v381 = vunpack.c.l.b16 %v171
    %v382 = vunpack.c.h.b16 %v171
    %v383 = vunpack.c.l.b16 %v172
    %v384 = vunpack.c.h.b16 %v172
    %v385 = vunpack.c.l.b16 %v173
    %v386 = vunpack.c.h.b16 %v173
    %v387 = vunpack.c.l.b16 %v174
    %v388 = vunpack.c.h.b16 %v174
    %v389 = vpack.c.b16 %v265, %v261
    %v390 = vpack.c.b16 %v266, %v262
    %v391 = vpack.c.b16 %v267, %v263
    %v392 = vpack.c.b16 %v268, %v264
    %v393 = vpack.c.b16 %v273, %v269
    %v394 = vpack.c.b16 %v274, %v270
    %v395 = vpack.c.b16 %v275, %v271
    %v396 = vpack.c.b16 %v276, %v272
    %v397 = vpack.c.b16 %v281, %v277
    %v398 = vpack.c.b16 %v282, %v278
    %v399 = vpack.c.b16 %v283, %v279
    %v400 = vpack.c.b16 %v284, %v280
    %v401 = vpack.c.b16 %v289, %v285
    %v402 = vpack.c.b16 %v290, %v286
    %v403 = vpack.c.b16 %v291, %v287
    %v404 = vpack.c.b16 %v292, %v288
    %v405 = vpack.c.b16 %v297, %v293
    %v406 = vpack.c.b16 %v298, %v294
    %v407 = vpack.c.b16 %v299, %v295
    %v408 = vpack.c.b16 %v300, %v296
    %v409 = vpack.c.b16 %v305, %v301
    %v410 = vpack.c.b16 %v306, %v302
    %v411 = vpack.c.b16 %v307, %v303
    %v412 = vpack.c.b16 %v308, %v304
    %v413 = vpack.c.b16 %v313, %v309
    %v414 = vpack.c.b16 %v314, %v310
    %v415 = vpack.c.b16 %v315, %v311
    %v416 = vpack.c.b16 %v316, %v312
    %v417 = vpack.c.b16 %v321, %v317
    %v418 = vpack.c.b16 %v322, %v318
    %v419 = vpack.c.b16 %v323, %v319
    %v420 = vpack.c.b16 %v324, %v320
    %v421 = vpack.c.b16 %v329, %v325
    %v422 = vpack.c.b16 %v330, %v326
    %v423 = vpack.c.b16 %v331, %v327
    %v424 = vpack.c.b16 %v332, %v328
    %v425 = vpack.c.b16 %v337, %v333
    %v426 = vpack.c.b16 %v338, %v334
    %v427 = vpack.c.b16 %v339, %v335
    %v428 = vpack.c.b16 %v340, %v336
    %v429 = vpack.c.b16 %v345, %v341
    %v430 = vpack.c.b16 %v346, %v342
    %v431 = vpack.c.b16 %v347, %v343
    %v432 = vpack.c.b16 %v348, %v344
    %v433 = vpack.c.b16 %v353, %v349
    %v434 = vpack.c.b16 %v354, %v350
    %v435 = vpack.c.b16 %v355, %v351
    %v436 = vpack.c.b16 %v356, %v352
    %v437 = vpack.c.b16 %v361, %v357
    %v438 = vpack.c.b16 %v362, %v358
    %v439 = vpack.c.b16 %v363, %v359
    %v440 = vpack.c.b16 %v364, %v360
    %v441 = vpack.c.b16 %v369, %v365
    %v442 = vpack.c.b16 %v370, %v366
    %v443 = vpack.c.b16 %v371, %v367
    %v444 = vpack.c.b16 %v372, %v368
    %v445 = vpack.c.b16 %v377, %v373
    %v446 = vpack.c.b16 %v378, %v374
    %v447 = vpack.c.b16 %v379, %v375
    %v448 = vpack.c.b16 %v380, %v376
    %v449 = vpack.c.b16 %v385, %v381
    %v450 = vpack.c.b16 %v386, %v382
    %v451 = vpack.c.b16 %v387, %v383
    %v452 = vpack.c.b16 %v388, %v384
    %517 = vmatprep.subr.bf16.mxu0 %v418
    %518 = vmatpush1.bf16.msra.mxu0 %v417
    %519 = vmatprep.subr.bf16.mxu0 %v414
    %520 = vmatpush1.bf16.msra.mxu0 %v413
    %521 = vmatprep.subr.bf16.mxu0 %v410
    %522 = vmatpush1.bf16.msra.mxu0 %v409
    %523 = vmatprep.subr.bf16.mxu0 %v406
    %524 = vmatpush1.bf16.msra.mxu0 %v405
    %525 = vmatprep.subr.bf16.mxu0 %v402
    %526 = vmatpush1.bf16.msra.mxu0 %v401
    %527 = vmatprep.subr.bf16.mxu0 %v398
    %528 = vmatpush1.bf16.msra.mxu0 %v397
    %529 = vmatprep.subr.bf16.mxu0 %v394
    %530 = vmatpush1.bf16.msra.mxu0 %v393
    %531 = vmatprep.subr.bf16.mxu0 %v390
    %532 = vmatpush1.bf16.msra.mxu0 %v389
    %533 = vmatprep.subr.bf16.mxu0 %v450
    %534 = vmatpush2.bf16.msra.mxu0 %v449
    %535 = vmatprep.subr.bf16.mxu0 %v446
    %536 = vmatpush2.bf16.msra.mxu0 %v445
    %537 = vmatprep.subr.bf16.mxu0 %v442
    %538 = vmatpush2.bf16.msra.mxu0 %v441
    %539 = vmatprep.subr.bf16.mxu0 %v438
    %540 = vmatpush2.bf16.msra.mxu0 %v437
    %541 = vmatprep.subr.bf16.mxu0 %v434
    %542 = vmatpush2.bf16.msra.mxu0 %v433
    %543 = vmatprep.subr.bf16.mxu0 %v430
    %544 = vmatpush2.bf16.msra.mxu0 %v429
    %545 = vmatprep.subr.bf16.mxu0 %v426
    %546 = vmatpush2.bf16.msra.mxu0 %v425
    %547 = vmatprep.subr.bf16.mxu0 %v422
    %548 = vmatpush2.bf16.msra.mxu0 %v421
    %549 = vmatprep.mubr.bf16.mxu0 %v110
    %550 = vmatmul.mubr.bf16.gmra.mxu0 %v109
    %v551 = vpop.f32.mrf.mxu0
    %v552 = vadd.f32 %v180, %v551
    %v553 = vpop.f32.mrf.mxu0
    %v554 = vadd.f32 %v184, %v553
    %v555 = vpop.f32.mrf.mxu0
    %v556 = vadd.f32 %v180, %v555
    %v557 = vpop.f32.mrf.mxu0
    %v558 = vadd.f32 %v184, %v557
    %559 = vdwg.mxu0
    %560 = vmatprep.subr.bf16.mxu0 %v420
    %561 = vmatpush1.bf16.msra.mxu0 %v419
    %562 = vmatprep.subr.bf16.mxu0 %v416
    %563 = vmatpush1.bf16.msra.mxu0 %v415
    %564 = vmatprep.subr.bf16.mxu0 %v412
    %565 = vmatpush1.bf16.msra.mxu0 %v411
    %566 = vmatprep.subr.bf16.mxu0 %v408
    %567 = vmatpush1.bf16.msra.mxu0 %v407
    %568 = vmatprep.subr.bf16.mxu0 %v404
    %569 = vmatpush1.bf16.msra.mxu0 %v403
    %570 = vmatprep.subr.bf16.mxu0 %v400
    %571 = vmatpush1.bf16.msra.mxu0 %v399
    %572 = vmatprep.subr.bf16.mxu0 %v396
    %573 = vmatpush1.bf16.msra.mxu0 %v395
    %574 = vmatprep.subr.bf16.mxu0 %v392
    %575 = vmatpush1.bf16.msra.mxu0 %v391
    %576 = vmatprep.subr.bf16.mxu0 %v452
    %577 = vmatpush2.bf16.msra.mxu0 %v451
    %578 = vmatprep.subr.bf16.mxu0 %v448
    %579 = vmatpush2.bf16.msra.mxu0 %v447
    %580 = vmatprep.subr.bf16.mxu0 %v444
    %581 = vmatpush2.bf16.msra.mxu0 %v443
    %582 = vmatprep.subr.bf16.mxu0 %v440
    %583 = vmatpush2.bf16.msra.mxu0 %v439
    %584 = vmatprep.subr.bf16.mxu0 %v436
    %585 = vmatpush2.bf16.msra.mxu0 %v435
    %586 = vmatprep.subr.bf16.mxu0 %v432
    %587 = vmatpush2.bf16.msra.mxu0 %v431
    %588 = vmatprep.subr.bf16.mxu0 %v428
    %589 = vmatpush2.bf16.msra.mxu0 %v427
    %590 = vmatprep.subr.bf16.mxu0 %v424
    %591 = vmatpush2.bf16.msra.mxu0 %v423
    %592 = vmatprep.mubr.bf16.mxu0 %v110
    %593 = vmatmul.mubr.bf16.gmra.mxu0 %v109
    %v594 = vpop.f32.mrf.mxu0
    %v595 = vadd.f32 %v188, %v594
    %v596 = vpop.f32.mrf.mxu0
    %v597 = vadd.f32 %v192, %v596
    %v598 = vpop.f32.mrf.mxu0
    %v599 = vadd.f32 %v188, %v598
    %v600 = vpop.f32.mrf.mxu0
    %v601 = vadd.f32 %v192, %v600
    %602 = vdwg.mxu0
    %v603 = vmax.f32 %v552, 0.0
    %v604 = vmax.f32 %v554, 0.0
    %v605 = vmax.f32 %v595, 0.0
    %v606 = vmax.f32 %v597, 0.0
    %v607 = vmax.f32 %v556, 0.0
    %v608 = vmax.f32 %v558, 0.0
    %v609 = vmax.f32 %v599, 0.0
    %v610 = vmax.f32 %v601, 0.0
    %v611 = vpack.c.bf16 %v607, %v603
    %v612 = vpack.c.bf16 %v608, %v604
    %v613 = vpack.c.bf16 %v609, %v605
    %v614 = vpack.c.bf16 %v610, %v606
    %v615 = vld [vmem:[#allocation7] sm:$0xff]
    %v616 = vld [vmem:[#allocation7 + $0x8] sm:$0xff]
    %v617 = vld [vmem:[#allocation7 + $0x10] sm:$0xff]
    %v618 = vld [vmem:[#allocation7 + $0x18] sm:$0xff]
    %v619 = vld [vmem:[#allocation7 + $0x20] sm:$0xff]
    %v620 = vld [vmem:[#allocation7 + $0x28] sm:$0xff]
    %v621 = vld [vmem:[#allocation7 + $0x30] sm:$0xff]
    %v622 = vld [vmem:[#allocation7 + $0x38] sm:$0xff]
    %v623 = vld [vmem:[#allocation7 + $0x40] sm:$0xff]
    %v624 = vld [vmem:[#allocation7 + $0x48] sm:$0xff]
    %v625 = vld [vmem:[#allocation7 + $0x50] sm:$0xff]
    %v626 = vld [vmem:[#allocation7 + $0x58] sm:$0xff]
    %v627 = vld [vmem:[#allocation7 + $0x60] sm:$0xff]
    %v628 = vld [vmem:[#allocation7 + $0x68] sm:$0xff]
    %v629 = vld [vmem:[#allocation7 + $0x70] sm:$0xff]
    %v630 = vld [vmem:[#allocation7 + $0x78] sm:$0xff]
    %v631 = vld [vmem:[#allocation7 + $0x80] sm:$0xff]
    %v632 = vld [vmem:[#allocation7 + $0x88] sm:$0xff]
    %v633 = vld [vmem:[#allocation7 + $0x90] sm:$0xff]
    %v634 = vld [vmem:[#allocation7 + $0x98] sm:$0xff]
    %v635 = vld [vmem:[#allocation7 + $0xa0] sm:$0xff]
    %v636 = vld [vmem:[#allocation7 + $0xa8] sm:$0xff]
    %v637 = vld [vmem:[#allocation7 + $0xb0] sm:$0xff]
    %v638 = vld [vmem:[#allocation7 + $0xb8] sm:$0xff]
    %v639 = vld [vmem:[#allocation7 + $0xc0] sm:$0xff]
    %v640 = vld [vmem:[#allocation7 + $0xc8] sm:$0xff]
    %v641 = vld [vmem:[#allocation7 + $0xd0] sm:$0xff]
    %v642 = vld [vmem:[#allocation7 + $0xd8] sm:$0xff]
    %v643 = vld [vmem:[#allocation7 + $0xe0] sm:$0xff]
    %v644 = vld [vmem:[#allocation7 + $0xe8] sm:$0xff]
    %v645 = vld [vmem:[#allocation7 + $0xf0] sm:$0xff]
    %v646 = vld [vmem:[#allocation7 + $0xf8] sm:$0xff]
    %v647 = vld [vmem:[#allocation7 + $0x100] sm:$0xff]
    %v648 = vld [vmem:[#allocation7 + $0x108] sm:$0xff]
    %v649 = vld [vmem:[#allocation7 + $0x110] sm:$0xff]
    %v650 = vld [vmem:[#allocation7 + $0x118] sm:$0xff]
    %v651 = vld [vmem:[#allocation7 + $0x120] sm:$0xff]
    %v652 = vld [vmem:[#allocation7 + $0x128] sm:$0xff]
    %v653 = vld [vmem:[#allocation7 + $0x130] sm:$0xff]
    %v654 = vld [vmem:[#allocation7 + $0x138] sm:$0xff]
    %v655 = vld [vmem:[#allocation7 + $0x140] sm:$0xff]
    %v656 = vld [vmem:[#allocation7 + $0x148] sm:$0xff]
    %v657 = vld [vmem:[#allocation7 + $0x150] sm:$0xff]
    %v658 = vld [vmem:[#allocation7 + $0x158] sm:$0xff]
    %v659 = vld [vmem:[#allocation7 + $0x160] sm:$0xff]
    %v660 = vld [vmem:[#allocation7 + $0x168] sm:$0xff]
    %v661 = vld [vmem:[#allocation7 + $0x170] sm:$0xff]
    %v662 = vld [vmem:[#allocation7 + $0x178] sm:$0xff]
    %v663 = vld [vmem:[#allocation7 + $0x180] sm:$0xff]
    %v664 = vld [vmem:[#allocation7 + $0x188] sm:$0xff]
    %v665 = vld [vmem:[#allocation7 + $0x190] sm:$0xff]
    %v666 = vld [vmem:[#allocation7 + $0x198] sm:$0xff]
    %v667 = vld [vmem:[#allocation7 + $0x1a0] sm:$0xff]
    %v668 = vld [vmem:[#allocation7 + $0x1a8] sm:$0xff]
    %v669 = vld [vmem:[#allocation7 + $0x1b0] sm:$0xff]
    %v670 = vld [vmem:[#allocation7 + $0x1b8] sm:$0xff]
    %v671 = vld [vmem:[#allocation7 + $0x1c0] sm:$0xff]
    %v672 = vld [vmem:[#allocation7 + $0x1c8] sm:$0xff]
    %v673 = vld [vmem:[#allocation7 + $0x1d0] sm:$0xff]
    %v674 = vld [vmem:[#allocation7 + $0x1d8] sm:$0xff]
    %v675 = vld [vmem:[#allocation7 + $0x1e0] sm:$0xff]
    %v676 = vld [vmem:[#allocation7 + $0x1e8] sm:$0xff]
    %v677 = vld [vmem:[#allocation7 + $0x1f0] sm:$0xff]
    %v678 = vld [vmem:[#allocation7 + $0x1f8] sm:$0xff]
    %v679 = vld [vmem:[#allocation7 + $0x200] sm:$0xff]
    %v680 = vld [vmem:[#allocation7 + $0x208] sm:$0xff]
    %v681 = vld [vmem:[#allocation7 + $0x210] sm:$0xff]
    %v682 = vld [vmem:[#allocation7 + $0x218] sm:$0xff]
    %v683 = vld [vmem:[#allocation7 + $0x220] sm:$0xff]
    %v684 = vld [vmem:[#allocation7 + $0x228] sm:$0xff]
    %v685 = vld [vmem:[#allocation7 + $0x230] sm:$0xff]
    %v686 = vld [vmem:[#allocation7 + $0x238] sm:$0xff]
    %v687 = vld [vmem:[#allocation7 + $0x240] sm:$0xff]
    %v688 = vld [vmem:[#allocation7 + $0x248] sm:$0xff]
    %v689 = vld [vmem:[#allocation7 + $0x250] sm:$0xff]
    %v690 = vld [vmem:[#allocation7 + $0x258] sm:$0xff]
    %v691 = vld [vmem:[#allocation7 + $0x260] sm:$0xff]
    %v692 = vld [vmem:[#allocation7 + $0x268] sm:$0xff]
    %v693 = vld [vmem:[#allocation7 + $0x270] sm:$0xff]
    %v694 = vld [vmem:[#allocation7 + $0x278] sm:$0xff]
    %v695 = vld [vmem:[#allocation7 + $0x280] sm:$0xff]
    %v696 = vld [vmem:[#allocation7 + $0x288] sm:$0xff]
    %v697 = vld [vmem:[#allocation7 + $0x290] sm:$0xff]
    %v698 = vld [vmem:[#allocation7 + $0x298] sm:$0xff]
    %v699 = vld [vmem:[#allocation7 + $0x2a0] sm:$0xff]
    %v700 = vld [vmem:[#allocation7 + $0x2a8] sm:$0xff]
    %v701 = vld [vmem:[#allocation7 + $0x2b0] sm:$0xff]
    %v702 = vld [vmem:[#allocation7 + $0x2b8] sm:$0xff]
    %v703 = vld [vmem:[#allocation7 + $0x2c0] sm:$0xff]
    %v704 = vld [vmem:[#allocation7 + $0x2c8] sm:$0xff]
    %v705 = vld [vmem:[#allocation7 + $0x2d0] sm:$0xff]
    %v706 = vld [vmem:[#allocation7 + $0x2d8] sm:$0xff]
    %v707 = vld [vmem:[#allocation7 + $0x2e0] sm:$0xff]
    %v708 = vld [vmem:[#allocation7 + $0x2e8] sm:$0xff]
    %v709 = vld [vmem:[#allocation7 + $0x2f0] sm:$0xff]
    %v710 = vld [vmem:[#allocation7 + $0x2f8] sm:$0xff]
    %v711 = vld [vmem:[#allocation7 + $0x300] sm:$0xff]
    %v712 = vld [vmem:[#allocation7 + $0x308] sm:$0xff]
    %v713 = vld [vmem:[#allocation7 + $0x310] sm:$0xff]
    %v714 = vld [vmem:[#allocation7 + $0x318] sm:$0xff]
    %v715 = vld [vmem:[#allocation7 + $0x320] sm:$0xff]
    %v716 = vld [vmem:[#allocation7 + $0x328] sm:$0xff]
    %v717 = vld [vmem:[#allocation7 + $0x330] sm:$0xff]
    %v718 = vld [vmem:[#allocation7 + $0x338] sm:$0xff]
    %v719 = vld [vmem:[#allocation7 + $0x340] sm:$0xff]
    %v720 = vld [vmem:[#allocation7 + $0x348] sm:$0xff]
    %v721 = vld [vmem:[#allocation7 + $0x350] sm:$0xff]
    %v722 = vld [vmem:[#allocation7 + $0x358] sm:$0xff]
    %v723 = vld [vmem:[#allocation7 + $0x360] sm:$0xff]
    %v724 = vld [vmem:[#allocation7 + $0x368] sm:$0xff]
    %v725 = vld [vmem:[#allocation7 + $0x370] sm:$0xff]
    %v726 = vld [vmem:[#allocation7 + $0x378] sm:$0xff]
    %v727 = vld [vmem:[#allocation7 + $0x380] sm:$0xff]
    %v728 = vld [vmem:[#allocation7 + $0x388] sm:$0xff]
    %v729 = vld [vmem:[#allocation7 + $0x390] sm:$0xff]
    %v730 = vld [vmem:[#allocation7 + $0x398] sm:$0xff]
    %v731 = vld [vmem:[#allocation7 + $0x3a0] sm:$0xff]
    %v732 = vld [vmem:[#allocation7 + $0x3a8] sm:$0xff]
    %v733 = vld [vmem:[#allocation7 + $0x3b0] sm:$0xff]
    %v734 = vld [vmem:[#allocation7 + $0x3b8] sm:$0xff]
    %v735 = vld [vmem:[#allocation7 + $0x3c0] sm:$0xff]
    %v736 = vld [vmem:[#allocation7 + $0x3c8] sm:$0xff]
    %v737 = vld [vmem:[#allocation7 + $0x3d0] sm:$0xff]
    %v738 = vld [vmem:[#allocation7 + $0x3d8] sm:$0xff]
    %v739 = vld [vmem:[#allocation7 + $0x3e0] sm:$0xff]
    %v740 = vld [vmem:[#allocation7 + $0x3e8] sm:$0xff]
    %v741 = vld [vmem:[#allocation7 + $0x3f0] sm:$0xff]
    %v742 = vld [vmem:[#allocation7 + $0x3f8] sm:$0xff]
    %v743 = vld [vmem:[#allocation9] sm:$0xf]
    %v745 = vlaneseq
    %v746 = vshrl.u32 %v745, 7
    %v747 = vsub.s32 0, %v746
    %v748 = vrot.slane %v743, %v747
    %v749 = vlaneseq
    %v750 = vshrl.u32 %v749, 7
    %v751 = vsub.s32 1, %v750
    %v752 = vrot.slane %v743, %v751
    %v753 = vlaneseq
    %v754 = vshrl.u32 %v753, 7
    %v755 = vsub.s32 2, %v754
    %v756 = vrot.slane %v743, %v755
    %v757 = vlaneseq
    %v758 = vshrl.u32 %v757, 7
    %v759 = vsub.s32 3, %v758
    %v760 = vrot.slane %v743, %v759
    %v893 = vunpack.c.l.b16 %v615
    %v894 = vunpack.c.h.b16 %v615
    %v895 = vunpack.c.l.b16 %v616
    %v896 = vunpack.c.h.b16 %v616
    %v897 = vunpack.c.l.b16 %v617
    %v898 = vunpack.c.h.b16 %v617
    %v899 = vunpack.c.l.b16 %v618
    %v900 = vunpack.c.h.b16 %v618
    %v901 = vunpack.c.l.b16 %v619
    %v902 = vunpack.c.h.b16 %v619
    %v903 = vunpack.c.l.b16 %v620
    %v904 = vunpack.c.h.b16 %v620
    %v905 = vunpack.c.l.b16 %v621
    %v906 = vunpack.c.h.b16 %v621
    %v907 = vunpack.c.l.b16 %v622
    %v908 = vunpack.c.h.b16 %v622
    %v909 = vunpack.c.l.b16 %v623
    %v910 = vunpack.c.h.b16 %v623
    %v911 = vunpack.c.l.b16 %v624
    %v912 = vunpack.c.h.b16 %v624
    %v913 = vunpack.c.l.b16 %v625
    %v914 = vunpack.c.h.b16 %v625
    %v915 = vunpack.c.l.b16 %v626
    %v916 = vunpack.c.h.b16 %v626
    %v917 = vunpack.c.l.b16 %v627
    %v918 = vunpack.c.h.b16 %v627
    %v919 = vunpack.c.l.b16 %v628
    %v920 = vunpack.c.h.b16 %v628
    %v921 = vunpack.c.l.b16 %v629
    %v922 = vunpack.c.h.b16 %v629
    %v923 = vunpack.c.l.b16 %v630
    %v924 = vunpack.c.h.b16 %v630
    %v925 = vunpack.c.l.b16 %v631
    %v926 = vunpack.c.h.b16 %v631
    %v927 = vunpack.c.l.b16 %v632
    %v928 = vunpack.c.h.b16 %v632
    %v929 = vunpack.c.l.b16 %v633
    %v930 = vunpack.c.h.b16 %v633
    %v931 = vunpack.c.l.b16 %v634
    %v932 = vunpack.c.h.b16 %v634
    %v933 = vunpack.c.l.b16 %v635
    %v934 = vunpack.c.h.b16 %v635
    %v935 = vunpack.c.l.b16 %v636
    %v936 = vunpack.c.h.b16 %v636
    %v937 = vunpack.c.l.b16 %v637
    %v938 = vunpack.c.h.b16 %v637
    %v939 = vunpack.c.l.b16 %v638
    %v940 = vunpack.c.h.b16 %v638
    %v941 = vunpack.c.l.b16 %v639
    %v942 = vunpack.c.h.b16 %v639
    %v943 = vunpack.c.l.b16 %v640
    %v944 = vunpack.c.h.b16 %v640
    %v945 = vunpack.c.l.b16 %v641
    %v946 = vunpack.c.h.b16 %v641
    %v947 = vunpack.c.l.b16 %v642
    %v948 = vunpack.c.h.b16 %v642
    %v949 = vunpack.c.l.b16 %v643
    %v950 = vunpack.c.h.b16 %v643
    %v951 = vunpack.c.l.b16 %v644
    %v952 = vunpack.c.h.b16 %v644
    %v953 = vunpack.c.l.b16 %v645
    %v954 = vunpack.c.h.b16 %v645
    %v955 = vunpack.c.l.b16 %v646
    %v956 = vunpack.c.h.b16 %v646
    %v957 = vunpack.c.l.b16 %v647
    %v958 = vunpack.c.h.b16 %v647
    %v959 = vunpack.c.l.b16 %v648
    %v960 = vunpack.c.h.b16 %v648
    %v961 = vunpack.c.l.b16 %v649
    %v962 = vunpack.c.h.b16 %v649
    %v963 = vunpack.c.l.b16 %v650
    %v964 = vunpack.c.h.b16 %v650
    %v965 = vunpack.c.l.b16 %v651
    %v966 = vunpack.c.h.b16 %v651
    %v967 = vunpack.c.l.b16 %v652
    %v968 = vunpack.c.h.b16 %v652
    %v969 = vunpack.c.l.b16 %v653
    %v970 = vunpack.c.h.b16 %v653
    %v971 = vunpack.c.l.b16 %v654
    %v972 = vunpack.c.h.b16 %v654
    %v973 = vunpack.c.l.b16 %v655
    %v974 = vunpack.c.h.b16 %v655
    %v975 = vunpack.c.l.b16 %v656
    %v976 = vunpack.c.h.b16 %v656
    %v977 = vunpack.c.l.b16 %v657
    %v978 = vunpack.c.h.b16 %v657
    %v979 = vunpack.c.l.b16 %v658
    %v980 = vunpack.c.h.b16 %v658
    %v981 = vunpack.c.l.b16 %v659
    %v982 = vunpack.c.h.b16 %v659
    %v983 = vunpack.c.l.b16 %v660
    %v984 = vunpack.c.h.b16 %v660
    %v985 = vunpack.c.l.b16 %v661
    %v986 = vunpack.c.h.b16 %v661
    %v987 = vunpack.c.l.b16 %v662
    %v988 = vunpack.c.h.b16 %v662
    %v989 = vunpack.c.l.b16 %v663
    %v990 = vunpack.c.h.b16 %v663
    %v991 = vunpack.c.l.b16 %v664
    %v992 = vunpack.c.h.b16 %v664
    %v993 = vunpack.c.l.b16 %v665
    %v994 = vunpack.c.h.b16 %v665
    %v995 = vunpack.c.l.b16 %v666
    %v996 = vunpack.c.h.b16 %v666
    %v997 = vunpack.c.l.b16 %v667
    %v998 = vunpack.c.h.b16 %v667
    %v999 = vunpack.c.l.b16 %v668
    %v1000 = vunpack.c.h.b16 %v668
    %v1001 = vunpack.c.l.b16 %v669
    %v1002 = vunpack.c.h.b16 %v669
    %v1003 = vunpack.c.l.b16 %v670
    %v1004 = vunpack.c.h.b16 %v670
    %v1005 = vunpack.c.l.b16 %v671
    %v1006 = vunpack.c.h.b16 %v671
    %v1007 = vunpack.c.l.b16 %v672
    %v1008 = vunpack.c.h.b16 %v672
    %v1009 = vunpack.c.l.b16 %v673
    %v1010 = vunpack.c.h.b16 %v673
    %v1011 = vunpack.c.l.b16 %v674
    %v1012 = vunpack.c.h.b16 %v674
    %v1013 = vunpack.c.l.b16 %v675
    %v1014 = vunpack.c.h.b16 %v675
    %v1015 = vunpack.c.l.b16 %v676
    %v1016 = vunpack.c.h.b16 %v676
    %v1017 = vunpack.c.l.b16 %v677
    %v1018 = vunpack.c.h.b16 %v677
    %v1019 = vunpack.c.l.b16 %v678
    %v1020 = vunpack.c.h.b16 %v678
    %v1021 = vunpack.c.l.b16 %v679
    %v1022 = vunpack.c.h.b16 %v679
    %v1023 = vunpack.c.l.b16 %v680
    %v1024 = vunpack.c.h.b16 %v680
    %v1025 = vunpack.c.l.b16 %v681
    %v1026 = vunpack.c.h.b16 %v681
    %v1027 = vunpack.c.l.b16 %v682
    %v1028 = vunpack.c.h.b16 %v682
    %v1029 = vunpack.c.l.b16 %v683
    %v1030 = vunpack.c.h.b16 %v683
    %v1031 = vunpack.c.l.b16 %v684
    %v1032 = vunpack.c.h.b16 %v684
    %v1033 = vunpack.c.l.b16 %v685
    %v1034 = vunpack.c.h.b16 %v685
    %v1035 = vunpack.c.l.b16 %v686
    %v1036 = vunpack.c.h.b16 %v686
    %v1037 = vunpack.c.l.b16 %v687
    %v1038 = vunpack.c.h.b16 %v687
    %v1039 = vunpack.c.l.b16 %v688
    %v1040 = vunpack.c.h.b16 %v688
    %v1041 = vunpack.c.l.b16 %v689
    %v1042 = vunpack.c.h.b16 %v689
    %v1043 = vunpack.c.l.b16 %v690
    %v1044 = vunpack.c.h.b16 %v690
    %v1045 = vunpack.c.l.b16 %v691
    %v1046 = vunpack.c.h.b16 %v691
    %v1047 = vunpack.c.l.b16 %v692
    %v1048 = vunpack.c.h.b16 %v692
    %v1049 = vunpack.c.l.b16 %v693
    %v1050 = vunpack.c.h.b16 %v693
    %v1051 = vunpack.c.l.b16 %v694
    %v1052 = vunpack.c.h.b16 %v694
    %v1053 = vunpack.c.l.b16 %v695
    %v1054 = vunpack.c.h.b16 %v695
    %v1055 = vunpack.c.l.b16 %v696
    %v1056 = vunpack.c.h.b16 %v696
    %v1057 = vunpack.c.l.b16 %v697
    %v1058 = vunpack.c.h.b16 %v697
    %v1059 = vunpack.c.l.b16 %v698
    %v1060 = vunpack.c.h.b16 %v698
    %v1061 = vunpack.c.l.b16 %v699
    %v1062 = vunpack.c.h.b16 %v699
    %v1063 = vunpack.c.l.b16 %v700
    %v1064 = vunpack.c.h.b16 %v700
    %v1065 = vunpack.c.l.b16 %v701
    %v1066 = vunpack.c.h.b16 %v701
    %v1067 = vunpack.c.l.b16 %v702
    %v1068 = vunpack.c.h.b16 %v702
    %v1069 = vunpack.c.l.b16 %v703
    %v1070 = vunpack.c.h.b16 %v703
    %v1071 = vunpack.c.l.b16 %v704
    %v1072 = vunpack.c.h.b16 %v704
    %v1073 = vunpack.c.l.b16 %v705
    %v1074 = vunpack.c.h.b16 %v705
    %v1075 = vunpack.c.l.b16 %v706
    %v1076 = vunpack.c.h.b16 %v706
    %v1077 = vunpack.c.l.b16 %v707
    %v1078 = vunpack.c.h.b16 %v707
    %v1079 = vunpack.c.l.b16 %v708
    %v1080 = vunpack.c.h.b16 %v708
    %v1081 = vunpack.c.l.b16 %v709
    %v1082 = vunpack.c.h.b16 %v709
    %v1083 = vunpack.c.l.b16 %v710
    %v1084 = vunpack.c.h.b16 %v710
    %v1085 = vunpack.c.l.b16 %v711
    %v1086 = vunpack.c.h.b16 %v711
    %v1087 = vunpack.c.l.b16 %v712
    %v1088 = vunpack.c.h.b16 %v712
    %v1089 = vunpack.c.l.b16 %v713
    %v1090 = vunpack.c.h.b16 %v713
    %v1091 = vunpack.c.l.b16 %v714
    %v1092 = vunpack.c.h.b16 %v714
    %v1093 = vunpack.c.l.b16 %v715
    %v1094 = vunpack.c.h.b16 %v715
    %v1095 = vunpack.c.l.b16 %v716
    %v1096 = vunpack.c.h.b16 %v716
    %v1097 = vunpack.c.l.b16 %v717
    %v1098 = vunpack.c.h.b16 %v717
    %v1099 = vunpack.c.l.b16 %v718
    %v1100 = vunpack.c.h.b16 %v718
    %v1101 = vunpack.c.l.b16 %v719
    %v1102 = vunpack.c.h.b16 %v719
    %v1103 = vunpack.c.l.b16 %v720
    %v1104 = vunpack.c.h.b16 %v720
    %v1105 = vunpack.c.l.b16 %v721
    %v1106 = vunpack.c.h.b16 %v721
    %v1107 = vunpack.c.l.b16 %v722
    %v1108 = vunpack.c.h.b16 %v722
    %v1109 = vunpack.c.l.b16 %v723
    %v1110 = vunpack.c.h.b16 %v723
    %v1111 = vunpack.c.l.b16 %v724
    %v1112 = vunpack.c.h.b16 %v724
    %v1113 = vunpack.c.l.b16 %v725
    %v1114 = vunpack.c.h.b16 %v725
    %v1115 = vunpack.c.l.b16 %v726
    %v1116 = vunpack.c.h.b16 %v726
    %v1117 = vunpack.c.l.b16 %v727
    %v1118 = vunpack.c.h.b16 %v727
    %v1119 = vunpack.c.l.b16 %v728
    %v1120 = vunpack.c.h.b16 %v728
    %v1121 = vunpack.c.l.b16 %v729
    %v1122 = vunpack.c.h.b16 %v729
    %v1123 = vunpack.c.l.b16 %v730
    %v1124 = vunpack.c.h.b16 %v730
    %v1125 = vunpack.c.l.b16 %v731
    %v1126 = vunpack.c.h.b16 %v731
    %v1127 = vunpack.c.l.b16 %v732
    %v1128 = vunpack.c.h.b16 %v732
    %v1129 = vunpack.c.l.b16 %v733
    %v1130 = vunpack.c.h.b16 %v733
    %v1131 = vunpack.c.l.b16 %v734
    %v1132 = vunpack.c.h.b16 %v734
    %v1133 = vunpack.c.l.b16 %v735
    %v1134 = vunpack.c.h.b16 %v735
    %v1135 = vunpack.c.l.b16 %v736
    %v1136 = vunpack.c.h.b16 %v736
    %v1137 = vunpack.c.l.b16 %v737
    %v1138 = vunpack.c.h.b16 %v737
    %v1139 = vunpack.c.l.b16 %v738
    %v1140 = vunpack.c.h.b16 %v738
    %v1141 = vunpack.c.l.b16 %v739
    %v1142 = vunpack.c.h.b16 %v739
    %v1143 = vunpack.c.l.b16 %v740
    %v1144 = vunpack.c.h.b16 %v740
    %v1145 = vunpack.c.l.b16 %v741
    %v1146 = vunpack.c.h.b16 %v741
    %v1147 = vunpack.c.l.b16 %v742
    %v1148 = vunpack.c.h.b16 %v742
    %v1149 = vpack.c.b16 %v897, %v893
    %v1150 = vpack.c.b16 %v898, %v894
    %v1151 = vpack.c.b16 %v899, %v895
    %v1152 = vpack.c.b16 %v900, %v896
    %v1153 = vpack.c.b16 %v905, %v901
    %v1154 = vpack.c.b16 %v906, %v902
    %v1155 = vpack.c.b16 %v907, %v903
    %v1156 = vpack.c.b16 %v908, %v904
    %v1157 = vpack.c.b16 %v913, %v909
    %v1158 = vpack.c.b16 %v914, %v910
    %v1159 = vpack.c.b16 %v915, %v911
    %v1160 = vpack.c.b16 %v916, %v912
    %v1161 = vpack.c.b16 %v921, %v917
    %v1162 = vpack.c.b16 %v922, %v918
    %v1163 = vpack.c.b16 %v923, %v919
    %v1164 = vpack.c.b16 %v924, %v920
    %v1165 = vpack.c.b16 %v929, %v925
    %v1166 = vpack.c.b16 %v930, %v926
    %v1167 = vpack.c.b16 %v931, %v927
    %v1168 = vpack.c.b16 %v932, %v928
    %v1169 = vpack.c.b16 %v937, %v933
    %v1170 = vpack.c.b16 %v938, %v934
    %v1171 = vpack.c.b16 %v939, %v935
    %v1172 = vpack.c.b16 %v940, %v936
    %v1173 = vpack.c.b16 %v945, %v941
    %v1174 = vpack.c.b16 %v946, %v942
    %v1175 = vpack.c.b16 %v947, %v943
    %v1176 = vpack.c.b16 %v948, %v944
    %v1177 = vpack.c.b16 %v953, %v949
    %v1178 = vpack.c.b16 %v954, %v950
    %v1179 = vpack.c.b16 %v955, %v951
    %v1180 = vpack.c.b16 %v956, %v952
    %v1181 = vpack.c.b16 %v961, %v957
    %v1182 = vpack.c.b16 %v962, %v958
    %v1183 = vpack.c.b16 %v963, %v959
    %v1184 = vpack.c.b16 %v964, %v960
    %v1185 = vpack.c.b16 %v969, %v965
    %v1186 = vpack.c.b16 %v970, %v966
    %v1187 = vpack.c.b16 %v971, %v967
    %v1188 = vpack.c.b16 %v972, %v968
    %v1189 = vpack.c.b16 %v977, %v973
    %v1190 = vpack.c.b16 %v978, %v974
    %v1191 = vpack.c.b16 %v979, %v975
    %v1192 = vpack.c.b16 %v980, %v976
    %v1193 = vpack.c.b16 %v985, %v981
    %v1194 = vpack.c.b16 %v986, %v982
    %v1195 = vpack.c.b16 %v987, %v983
    %v1196 = vpack.c.b16 %v988, %v984
    %v1197 = vpack.c.b16 %v993, %v989
    %v1198 = vpack.c.b16 %v994, %v990
    %v1199 = vpack.c.b16 %v995, %v991
    %v1200 = vpack.c.b16 %v996, %v992
    %v1201 = vpack.c.b16 %v1001, %v997
    %v1202 = vpack.c.b16 %v1002, %v998
    %v1203 = vpack.c.b16 %v1003, %v999
    %v1204 = vpack.c.b16 %v1004, %v1000
    %v1205 = vpack.c.b16 %v1009, %v1005
    %v1206 = vpack.c.b16 %v1010, %v1006
    %v1207 = vpack.c.b16 %v1011, %v1007
    %v1208 = vpack.c.b16 %v1012, %v1008
    %v1209 = vpack.c.b16 %v1017, %v1013
    %v1210 = vpack.c.b16 %v1018, %v1014
    %v1211 = vpack.c.b16 %v1019, %v1015
    %v1212 = vpack.c.b16 %v1020, %v1016
    %v1213 = vpack.c.b16 %v1025, %v1021
    %v1214 = vpack.c.b16 %v1026, %v1022
    %v1215 = vpack.c.b16 %v1027, %v1023
    %v1216 = vpack.c.b16 %v1028, %v1024
    %v1217 = vpack.c.b16 %v1033, %v1029
    %v1218 = vpack.c.b16 %v1034, %v1030
    %v1219 = vpack.c.b16 %v1035, %v1031
    %v1220 = vpack.c.b16 %v1036, %v1032
    %v1221 = vpack.c.b16 %v1041, %v1037
    %v1222 = vpack.c.b16 %v1042, %v1038
    %v1223 = vpack.c.b16 %v1043, %v1039
    %v1224 = vpack.c.b16 %v1044, %v1040
    %v1225 = vpack.c.b16 %v1049, %v1045
    %v1226 = vpack.c.b16 %v1050, %v1046
    %v1227 = vpack.c.b16 %v1051, %v1047
    %v1228 = vpack.c.b16 %v1052, %v1048
    %v1229 = vpack.c.b16 %v1057, %v1053
    %v1230 = vpack.c.b16 %v1058, %v1054
    %v1231 = vpack.c.b16 %v1059, %v1055
    %v1232 = vpack.c.b16 %v1060, %v1056
    %v1233 = vpack.c.b16 %v1065, %v1061
    %v1234 = vpack.c.b16 %v1066, %v1062
    %v1235 = vpack.c.b16 %v1067, %v1063
    %v1236 = vpack.c.b16 %v1068, %v1064
    %v1237 = vpack.c.b16 %v1073, %v1069
    %v1238 = vpack.c.b16 %v1074, %v1070
    %v1239 = vpack.c.b16 %v1075, %v1071
    %v1240 = vpack.c.b16 %v1076, %v1072
    %v1241 = vpack.c.b16 %v1081, %v1077
    %v1242 = vpack.c.b16 %v1082, %v1078
    %v1243 = vpack.c.b16 %v1083, %v1079
    %v1244 = vpack.c.b16 %v1084, %v1080
    %v1245 = vpack.c.b16 %v1089, %v1085
    %v1246 = vpack.c.b16 %v1090, %v1086
    %v1247 = vpack.c.b16 %v1091, %v1087
    %v1248 = vpack.c.b16 %v1092, %v1088
    %v1249 = vpack.c.b16 %v1097, %v1093
    %v1250 = vpack.c.b16 %v1098, %v1094
    %v1251 = vpack.c.b16 %v1099, %v1095
    %v1252 = vpack.c.b16 %v1100, %v1096
    %v1253 = vpack.c.b16 %v1105, %v1101
    %v1254 = vpack.c.b16 %v1106, %v1102
    %v1255 = vpack.c.b16 %v1107, %v1103
    %v1256 = vpack.c.b16 %v1108, %v1104
    %v1257 = vpack.c.b16 %v1113, %v1109
    %v1258 = vpack.c.b16 %v1114, %v1110
    %v1259 = vpack.c.b16 %v1115, %v1111
    %v1260 = vpack.c.b16 %v1116, %v1112
    %v1261 = vpack.c.b16 %v1121, %v1117
    %v1262 = vpack.c.b16 %v1122, %v1118
    %v1263 = vpack.c.b16 %v1123, %v1119
    %v1264 = vpack.c.b16 %v1124, %v1120
    %v1265 = vpack.c.b16 %v1129, %v1125
    %v1266 = vpack.c.b16 %v1130, %v1126
    %v1267 = vpack.c.b16 %v1131, %v1127
    %v1268 = vpack.c.b16 %v1132, %v1128
    %v1269 = vpack.c.b16 %v1137, %v1133
    %v1270 = vpack.c.b16 %v1138, %v1134
    %v1271 = vpack.c.b16 %v1139, %v1135
    %v1272 = vpack.c.b16 %v1140, %v1136
    %v1273 = vpack.c.b16 %v1145, %v1141
    %v1274 = vpack.c.b16 %v1146, %v1142
    %v1275 = vpack.c.b16 %v1147, %v1143
    %v1276 = vpack.c.b16 %v1148, %v1144
    %1405 = vmatprep.subr.bf16.mxu0 %v1178
    %1406 = vmatpush1.bf16.msra.mxu0 %v1177
    %1407 = vmatprep.subr.bf16.mxu0 %v1174
    %1408 = vmatpush1.bf16.msra.mxu0 %v1173
    %1409 = vmatprep.subr.bf16.mxu0 %v1170
    %1410 = vmatpush1.bf16.msra.mxu0 %v1169
    %1411 = vmatprep.subr.bf16.mxu0 %v1166
    %1412 = vmatpush1.bf16.msra.mxu0 %v1165
    %1413 = vmatprep.subr.bf16.mxu0 %v1162
    %1414 = vmatpush1.bf16.msra.mxu0 %v1161
    %1415 = vmatprep.subr.bf16.mxu0 %v1158
    %1416 = vmatpush1.bf16.msra.mxu0 %v1157
    %1417 = vmatprep.subr.bf16.mxu0 %v1154
    %1418 = vmatpush1.bf16.msra.mxu0 %v1153
    %1419 = vmatprep.subr.bf16.mxu0 %v1150
    %1420 = vmatpush1.bf16.msra.mxu0 %v1149
    %1421 = vmatprep.subr.bf16.mxu0 %v1210
    %1422 = vmatpush2.bf16.msra.mxu0 %v1209
    %1423 = vmatprep.subr.bf16.mxu0 %v1206
    %1424 = vmatpush2.bf16.msra.mxu0 %v1205
    %1425 = vmatprep.subr.bf16.mxu0 %v1202
    %1426 = vmatpush2.bf16.msra.mxu0 %v1201
    %1427 = vmatprep.subr.bf16.mxu0 %v1198
    %1428 = vmatpush2.bf16.msra.mxu0 %v1197
    %1429 = vmatprep.subr.bf16.mxu0 %v1194
    %1430 = vmatpush2.bf16.msra.mxu0 %v1193
    %1431 = vmatprep.subr.bf16.mxu0 %v1190
    %1432 = vmatpush2.bf16.msra.mxu0 %v1189
    %1433 = vmatprep.subr.bf16.mxu0 %v1186
    %1434 = vmatpush2.bf16.msra.mxu0 %v1185
    %1435 = vmatprep.subr.bf16.mxu0 %v1182
    %1436 = vmatpush2.bf16.msra.mxu0 %v1181
    %1437 = vmatprep.mubr.bf16.mxu0 %v612
    %1438 = vmatmul.mubr.bf16.gmra.mxu0 %v611
    %v1439 = vpop.f32.mrf.mxu0
    %v1440 = vadd.f32 %v748, %v1439
    %v1441 = vpop.f32.mrf.mxu0
    %v1442 = vadd.f32 %v752, %v1441
    %v1443 = vpop.f32.mrf.mxu0
    %v1444 = vadd.f32 %v748, %v1443
    %v1445 = vpop.f32.mrf.mxu0
    %v1446 = vadd.f32 %v752, %v1445
    %1447 = vdwg.mxu0
    %1448 = vmatprep.subr.bf16.mxu0 %v1242
    %1449 = vmatpush1.bf16.msra.mxu0 %v1241
    %1450 = vmatprep.subr.bf16.mxu0 %v1238
    %1451 = vmatpush1.bf16.msra.mxu0 %v1237
    %1452 = vmatprep.subr.bf16.mxu0 %v1234
    %1453 = vmatpush1.bf16.msra.mxu0 %v1233
    %1454 = vmatprep.subr.bf16.mxu0 %v1230
    %1455 = vmatpush1.bf16.msra.mxu0 %v1229
    %1456 = vmatprep.subr.bf16.mxu0 %v1226
    %1457 = vmatpush1.bf16.msra.mxu0 %v1225
    %1458 = vmatprep.subr.bf16.mxu0 %v1222
    %1459 = vmatpush1.bf16.msra.mxu0 %v1221
    %1460 = vmatprep.subr.bf16.mxu0 %v1218
    %1461 = vmatpush1.bf16.msra.mxu0 %v1217
    %1462 = vmatprep.subr.bf16.mxu0 %v1214
    %1463 = vmatpush1.bf16.msra.mxu0 %v1213
    %1464 = vmatprep.subr.bf16.mxu0 %v1274
    %1465 = vmatpush2.bf16.msra.mxu0 %v1273
    %1466 = vmatprep.subr.bf16.mxu0 %v1270
    %1467 = vmatpush2.bf16.msra.mxu0 %v1269
    %1468 = vmatprep.subr.bf16.mxu0 %v1266
    %1469 = vmatpush2.bf16.msra.mxu0 %v1265
    %1470 = vmatprep.subr.bf16.mxu0 %v1262
    %1471 = vmatpush2.bf16.msra.mxu0 %v1261
    %1472 = vmatprep.subr.bf16.mxu0 %v1258
    %1473 = vmatpush2.bf16.msra.mxu0 %v1257
    %1474 = vmatprep.subr.bf16.mxu0 %v1254
    %1475 = vmatpush2.bf16.msra.mxu0 %v1253
    %1476 = vmatprep.subr.bf16.mxu0 %v1250
    %1477 = vmatpush2.bf16.msra.mxu0 %v1249
    %1478 = vmatprep.subr.bf16.mxu0 %v1246
    %1479 = vmatpush2.bf16.msra.mxu0 %v1245
    %1480 = vmatprep.mubr.bf16.mxu0 %v614
    %1481 = vmatmul.mubr.bf16.gmra.mxu0 %v613
    %v1482 = vpop.f32.mrf.mxu0
    %v1483 = vadd.f32 %v1440, %v1482
    %v1484 = vpop.f32.mrf.mxu0
    %v1485 = vadd.f32 %v1442, %v1484
    %v1486 = vpop.f32.mrf.mxu0
    %v1487 = vadd.f32 %v1444, %v1486
    %v1488 = vpop.f32.mrf.mxu0
    %v1489 = vadd.f32 %v1446, %v1488
    %1490 = vdwg.mxu0
    %1491 = vmatprep.subr.bf16.mxu0 %v1180
    %1492 = vmatpush1.bf16.msra.mxu0 %v1179
    %1493 = vmatprep.subr.bf16.mxu0 %v1176
    %1494 = vmatpush1.bf16.msra.mxu0 %v1175
    %1495 = vmatprep.subr.bf16.mxu0 %v1172
    %1496 = vmatpush1.bf16.msra.mxu0 %v1171
    %1497 = vmatprep.subr.bf16.mxu0 %v1168
    %1498 = vmatpush1.bf16.msra.mxu0 %v1167
    %1499 = vmatprep.subr.bf16.mxu0 %v1164
    %1500 = vmatpush1.bf16.msra.mxu0 %v1163
    %1501 = vmatprep.subr.bf16.mxu0 %v1160
    %1502 = vmatpush1.bf16.msra.mxu0 %v1159
    %1503 = vmatprep.subr.bf16.mxu0 %v1156
    %1504 = vmatpush1.bf16.msra.mxu0 %v1155
    %1505 = vmatprep.subr.bf16.mxu0 %v1152
    %1506 = vmatpush1.bf16.msra.mxu0 %v1151
    %1507 = vmatprep.subr.bf16.mxu0 %v1212
    %1508 = vmatpush2.bf16.msra.mxu0 %v1211
    %1509 = vmatprep.subr.bf16.mxu0 %v1208
    %1510 = vmatpush2.bf16.msra.mxu0 %v1207
    %1511 = vmatprep.subr.bf16.mxu0 %v1204
    %1512 = vmatpush2.bf16.msra.mxu0 %v1203
    %1513 = vmatprep.subr.bf16.mxu0 %v1200
    %1514 = vmatpush2.bf16.msra.mxu0 %v1199
    %1515 = vmatprep.subr.bf16.mxu0 %v1196
    %1516 = vmatpush2.bf16.msra.mxu0 %v1195
    %1517 = vmatprep.subr.bf16.mxu0 %v1192
    %1518 = vmatpush2.bf16.msra.mxu0 %v1191
    %1519 = vmatprep.subr.bf16.mxu0 %v1188
    %1520 = vmatpush2.bf16.msra.mxu0 %v1187
    %1521 = vmatprep.subr.bf16.mxu0 %v1184
    %1522 = vmatpush2.bf16.msra.mxu0 %v1183
    %1523 = vmatprep.mubr.bf16.mxu0 %v612
    %1524 = vmatmul.mubr.bf16.gmra.mxu0 %v611
    %v1525 = vpop.f32.mrf.mxu0
    %v1526 = vadd.f32 %v756, %v1525
    %v1527 = vpop.f32.mrf.mxu0
    %v1528 = vadd.f32 %v760, %v1527
    %v1529 = vpop.f32.mrf.mxu0
    %v1530 = vadd.f32 %v756, %v1529
    %v1531 = vpop.f32.mrf.mxu0
    %v1532 = vadd.f32 %v760, %v1531
    %1533 = vdwg.mxu0
    %1534 = vmatprep.subr.bf16.mxu0 %v1244
    %1535 = vmatpush1.bf16.msra.mxu0 %v1243
    %1536 = vmatprep.subr.bf16.mxu0 %v1240
    %1537 = vmatpush1.bf16.msra.mxu0 %v1239
    %1538 = vmatprep.subr.bf16.mxu0 %v1236
    %1539 = vmatpush1.bf16.msra.mxu0 %v1235
    %1540 = vmatprep.subr.bf16.mxu0 %v1232
    %1541 = vmatpush1.bf16.msra.mxu0 %v1231
    %1542 = vmatprep.subr.bf16.mxu0 %v1228
    %1543 = vmatpush1.bf16.msra.mxu0 %v1227
    %1544 = vmatprep.subr.bf16.mxu0 %v1224
    %1545 = vmatpush1.bf16.msra.mxu0 %v1223
    %1546 = vmatprep.subr.bf16.mxu0 %v1220
    %1547 = vmatpush1.bf16.msra.mxu0 %v1219
    %1548 = vmatprep.subr.bf16.mxu0 %v1216
    %1549 = vmatpush1.bf16.msra.mxu0 %v1215
    %1550 = vmatprep.subr.bf16.mxu0 %v1276
    %1551 = vmatpush2.bf16.msra.mxu0 %v1275
    %1552 = vmatprep.subr.bf16.mxu0 %v1272
    %1553 = vmatpush2.bf16.msra.mxu0 %v1271
    %1554 = vmatprep.subr.bf16.mxu0 %v1268
    %1555 = vmatpush2.bf16.msra.mxu0 %v1267
    %1556 = vmatprep.subr.bf16.mxu0 %v1264
    %1557 = vmatpush2.bf16.msra.mxu0 %v1263
    %1558 = vmatprep.subr.bf16.mxu0 %v1260
    %1559 = vmatpush2.bf16.msra.mxu0 %v1259
    %1560 = vmatprep.subr.bf16.mxu0 %v1256
    %1561 = vmatpush2.bf16.msra.mxu0 %v1255
    %1562 = vmatprep.subr.bf16.mxu0 %v1252
    %1563 = vmatpush2.bf16.msra.mxu0 %v1251
    %1564 = vmatprep.subr.bf16.mxu0 %v1248
    %1565 = vmatpush2.bf16.msra.mxu0 %v1247
    %1566 = vmatprep.mubr.bf16.mxu0 %v614
    %1567 = vmatmul.mubr.bf16.gmra.mxu0 %v613
    %v1568 = vpop.f32.mrf.mxu0
    %v1569 = vadd.f32 %v1526, %v1568
    %v1570 = vpop.f32.mrf.mxu0
    %v1571 = vadd.f32 %v1528, %v1570
    %v1572 = vpop.f32.mrf.mxu0
    %v1573 = vadd.f32 %v1530, %v1572
    %v1574 = vpop.f32.mrf.mxu0
    %v1575 = vadd.f32 %v1532, %v1574
    %1576 = vdwg.mxu0
    %v1577 = vmax.f32 %v1483, 0.0
    %v1578 = vmax.f32 %v1485, 0.0
    %v1579 = vmax.f32 %v1569, 0.0
    %v1580 = vmax.f32 %v1571, 0.0
    %v1581 = vmax.f32 %v1487, 0.0
    %v1582 = vmax.f32 %v1489, 0.0
    %v1583 = vmax.f32 %v1573, 0.0
    %v1584 = vmax.f32 %v1575, 0.0
    %v1585 = vpack.c.bf16 %v1581, %v1577
    %v1586 = vpack.c.bf16 %v1582, %v1578
    %v1587 = vpack.c.bf16 %v1583, %v1579
    %v1588 = vpack.c.bf16 %v1584, %v1580
    %v1589 = vld [vmem:[#allocation10] sm:$0xf]
    %v1590 = vld [vmem:[#allocation10 + $0x4] sm:$0xf]
    %v1591 = vld [vmem:[#allocation10 + $0x8] sm:$0xf]
    %v1592 = vld [vmem:[#allocation10 + $0xc] sm:$0xf]
    %v1593 = vld [vmem:[#allocation10 + $0x10] sm:$0xf]
    %v1594 = vld [vmem:[#allocation10 + $0x14] sm:$0xf]
    %v1595 = vld [vmem:[#allocation10 + $0x18] sm:$0xf]
    %v1596 = vld [vmem:[#allocation10 + $0x1c] sm:$0xf]
    %v1597 = vld [vmem:[#allocation10 + $0x20] sm:$0xf]
    %v1598 = vld [vmem:[#allocation10 + $0x24] sm:$0xf]
    %v1599 = vld [vmem:[#allocation10 + $0x28] sm:$0xf]
    %v1600 = vld [vmem:[#allocation10 + $0x2c] sm:$0xf]
    %v1601 = vld [vmem:[#allocation10 + $0x30] sm:$0xf]
    %v1602 = vld [vmem:[#allocation10 + $0x34] sm:$0xf]
    %v1603 = vld [vmem:[#allocation10 + $0x38] sm:$0xf]
    %v1604 = vld [vmem:[#allocation10 + $0x3c] sm:$0xf]
    %v1605 = vld [vmem:[#allocation10 + $0x40] sm:$0xf]
    %v1606 = vld [vmem:[#allocation10 + $0x44] sm:$0xf]
    %v1607 = vld [vmem:[#allocation10 + $0x48] sm:$0xf]
    %v1608 = vld [vmem:[#allocation10 + $0x4c] sm:$0xf]
    %v1609 = vld [vmem:[#allocation10 + $0x50] sm:$0xf]
    %v1610 = vld [vmem:[#allocation10 + $0x54] sm:$0xf]
    %v1611 = vld [vmem:[#allocation10 + $0x58] sm:$0xf]
    %v1612 = vld [vmem:[#allocation10 + $0x5c] sm:$0xf]
    %v1613 = vld [vmem:[#allocation10 + $0x60] sm:$0xf]
    %v1614 = vld [vmem:[#allocation10 + $0x64] sm:$0xf]
    %v1615 = vld [vmem:[#allocation10 + $0x68] sm:$0xf]
    %v1616 = vld [vmem:[#allocation10 + $0x6c] sm:$0xf]
    %v1617 = vld [vmem:[#allocation10 + $0x70] sm:$0xf]
    %v1618 = vld [vmem:[#allocation10 + $0x74] sm:$0xf]
    %v1619 = vld [vmem:[#allocation10 + $0x78] sm:$0xf]
    %v1620 = vld [vmem:[#allocation10 + $0x7c] sm:$0xf]
    %v1621 = vld [vmem:[#allocation10 + $0x80] sm:$0xf]
    %v1622 = vld [vmem:[#allocation10 + $0x84] sm:$0xf]
    %v1623 = vld [vmem:[#allocation10 + $0x88] sm:$0xf]
    %v1624 = vld [vmem:[#allocation10 + $0x8c] sm:$0xf]
    %v1625 = vld [vmem:[#allocation10 + $0x90] sm:$0xf]
    %v1626 = vld [vmem:[#allocation10 + $0x94] sm:$0xf]
    %v1627 = vld [vmem:[#allocation10 + $0x98] sm:$0xf]
    %v1628 = vld [vmem:[#allocation10 + $0x9c] sm:$0xf]
    %v1629 = vld [vmem:[#allocation10 + $0xa0] sm:$0xf]
    %v1630 = vld [vmem:[#allocation10 + $0xa4] sm:$0xf]
    %v1631 = vld [vmem:[#allocation10 + $0xa8] sm:$0xf]
    %v1632 = vld [vmem:[#allocation10 + $0xac] sm:$0xf]
    %v1633 = vld [vmem:[#allocation10 + $0xb0] sm:$0xf]
    %v1634 = vld [vmem:[#allocation10 + $0xb4] sm:$0xf]
    %v1635 = vld [vmem:[#allocation10 + $0xb8] sm:$0xf]
    %v1636 = vld [vmem:[#allocation10 + $0xbc] sm:$0xf]
    %v1637 = vld [vmem:[#allocation10 + $0xc0] sm:$0xf]
    %v1638 = vld [vmem:[#allocation10 + $0xc4] sm:$0xf]
    %v1639 = vld [vmem:[#allocation10 + $0xc8] sm:$0xf]
    %v1640 = vld [vmem:[#allocation10 + $0xcc] sm:$0xf]
    %v1641 = vld [vmem:[#allocation10 + $0xd0] sm:$0xf]
    %v1642 = vld [vmem:[#allocation10 + $0xd4] sm:$0xf]
    %v1643 = vld [vmem:[#allocation10 + $0xd8] sm:$0xf]
    %v1644 = vld [vmem:[#allocation10 + $0xdc] sm:$0xf]
    %v1645 = vld [vmem:[#allocation10 + $0xe0] sm:$0xf]
    %v1646 = vld [vmem:[#allocation10 + $0xe4] sm:$0xf]
    %v1647 = vld [vmem:[#allocation10 + $0xe8] sm:$0xf]
    %v1648 = vld [vmem:[#allocation10 + $0xec] sm:$0xf]
    %v1649 = vld [vmem:[#allocation10 + $0xf0] sm:$0xf]
    %v1650 = vld [vmem:[#allocation10 + $0xf4] sm:$0xf]
    %v1651 = vld [vmem:[#allocation10 + $0xf8] sm:$0xf]
    %v1652 = vld [vmem:[#allocation10 + $0xfc] sm:$0xf]
    %v1653 = vld [vmem:[%s6] sm:$0x1]
    %v1655 = vlaneseq
    %v1656 = vshrl.u32 %v1655, 7
    %v1657 = vsub.s32 0, %v1656
    %v1658 = vrot.slane %v1653, %v1657
    %v1724 = vunpack.c.l.b16 %v1589
    %v1725 = vunpack.c.l.b16 %v1590
    %v1726 = vunpack.c.l.b16 %v1591
    %v1727 = vunpack.c.l.b16 %v1592
    %v1728 = vunpack.c.l.b16 %v1593
    %v1729 = vunpack.c.l.b16 %v1594
    %v1730 = vunpack.c.l.b16 %v1595
    %v1731 = vunpack.c.l.b16 %v1596
    %v1732 = vunpack.c.l.b16 %v1597
    %v1733 = vunpack.c.l.b16 %v1598
    %v1734 = vunpack.c.l.b16 %v1599
    %v1735 = vunpack.c.l.b16 %v1600
    %v1736 = vunpack.c.l.b16 %v1601
    %v1737 = vunpack.c.l.b16 %v1602
    %v1738 = vunpack.c.l.b16 %v1603
    %v1739 = vunpack.c.l.b16 %v1604
    %v1740 = vunpack.c.l.b16 %v1605
    %v1741 = vunpack.c.l.b16 %v1606
    %v1742 = vunpack.c.l.b16 %v1607
    %v1743 = vunpack.c.l.b16 %v1608
    %v1744 = vunpack.c.l.b16 %v1609
    %v1745 = vunpack.c.l.b16 %v1610
    %v1746 = vunpack.c.l.b16 %v1611
    %v1747 = vunpack.c.l.b16 %v1612
    %v1748 = vunpack.c.l.b16 %v1613
    %v1749 = vunpack.c.l.b16 %v1614
    %v1750 = vunpack.c.l.b16 %v1615
    %v1751 = vunpack.c.l.b16 %v1616
    %v1752 = vunpack.c.l.b16 %v1617
    %v1753 = vunpack.c.l.b16 %v1618
    %v1754 = vunpack.c.l.b16 %v1619
    %v1755 = vunpack.c.l.b16 %v1620
    %v1756 = vunpack.c.l.b16 %v1621
    %v1757 = vunpack.c.l.b16 %v1622
    %v1758 = vunpack.c.l.b16 %v1623
    %v1759 = vunpack.c.l.b16 %v1624
    %v1760 = vunpack.c.l.b16 %v1625
    %v1761 = vunpack.c.l.b16 %v1626
    %v1762 = vunpack.c.l.b16 %v1627
    %v1763 = vunpack.c.l.b16 %v1628
    %v1764 = vunpack.c.l.b16 %v1629
    %v1765 = vunpack.c.l.b16 %v1630
    %v1766 = vunpack.c.l.b16 %v1631
    %v1767 = vunpack.c.l.b16 %v1632
    %v1768 = vunpack.c.l.b16 %v1633
    %v1769 = vunpack.c.l.b16 %v1634
    %v1770 = vunpack.c.l.b16 %v1635
    %v1771 = vunpack.c.l.b16 %v1636
    %v1772 = vunpack.c.l.b16 %v1637
    %v1773 = vunpack.c.l.b16 %v1638
    %v1774 = vunpack.c.l.b16 %v1639
    %v1775 = vunpack.c.l.b16 %v1640
    %v1776 = vunpack.c.l.b16 %v1641
    %v1777 = vunpack.c.l.b16 %v1642
    %v1778 = vunpack.c.l.b16 %v1643
    %v1779 = vunpack.c.l.b16 %v1644
    %v1780 = vunpack.c.l.b16 %v1645
    %v1781 = vunpack.c.l.b16 %v1646
    %v1782 = vunpack.c.l.b16 %v1647
    %v1783 = vunpack.c.l.b16 %v1648
    %v1784 = vunpack.c.l.b16 %v1649
    %v1785 = vunpack.c.l.b16 %v1650
    %v1786 = vunpack.c.l.b16 %v1651
    %v1787 = vunpack.c.l.b16 %v1652
    %v1788 = vpack.c.b16 %v1725, %v1724
    %v1789 = vpack.c.b16 %v1727, %v1726
    %v1790 = vpack.c.b16 %v1729, %v1728
    %v1791 = vpack.c.b16 %v1731, %v1730
    %v1792 = vpack.c.b16 %v1733, %v1732
    %v1793 = vpack.c.b16 %v1735, %v1734
    %v1794 = vpack.c.b16 %v1737, %v1736
    %v1795 = vpack.c.b16 %v1739, %v1738
    %v1796 = vpack.c.b16 %v1741, %v1740
    %v1797 = vpack.c.b16 %v1743, %v1742
    %v1798 = vpack.c.b16 %v1745, %v1744
    %v1799 = vpack.c.b16 %v1747, %v1746
    %v1800 = vpack.c.b16 %v1749, %v1748
    %v1801 = vpack.c.b16 %v1751, %v1750
    %v1802 = vpack.c.b16 %v1753, %v1752
    %v1803 = vpack.c.b16 %v1755, %v1754
    %v1804 = vpack.c.b16 %v1757, %v1756
    %v1805 = vpack.c.b16 %v1759, %v1758
    %v1806 = vpack.c.b16 %v1761, %v1760
    %v1807 = vpack.c.b16 %v1763, %v1762
    %v1808 = vpack.c.b16 %v1765, %v1764
    %v1809 = vpack.c.b16 %v1767, %v1766
    %v1810 = vpack.c.b16 %v1769, %v1768
    %v1811 = vpack.c.b16 %v1771, %v1770
    %v1812 = vpack.c.b16 %v1773, %v1772
    %v1813 = vpack.c.b16 %v1775, %v1774
    %v1814 = vpack.c.b16 %v1777, %v1776
    %v1815 = vpack.c.b16 %v1779, %v1778
    %v1816 = vpack.c.b16 %v1781, %v1780
    %v1817 = vpack.c.b16 %v1783, %v1782
    %v1818 = vpack.c.b16 %v1785, %v1784
    %v1819 = vpack.c.b16 %v1787, %v1786
    %1852 = vmatprep.subr.bf16.mxu0 0
    %1853 = vmatpush1.bf16.msra.mxu0 %v1795
    %1854 = vmatprep.subr.bf16.mxu0 0
    %1855 = vmatpush1.bf16.msra.mxu0 %v1794
    %1856 = vmatprep.subr.bf16.mxu0 0
    %1857 = vmatpush1.bf16.msra.mxu0 %v1793
    %1858 = vmatprep.subr.bf16.mxu0 0
    %1859 = vmatpush1.bf16.msra.mxu0 %v1792
    %1860 = vmatprep.subr.bf16.mxu0 0
    %1861 = vmatpush1.bf16.msra.mxu0 %v1791
    %1862 = vmatprep.subr.bf16.mxu0 0
    %1863 = vmatpush1.bf16.msra.mxu0 %v1790
    %1864 = vmatprep.subr.bf16.mxu0 0
    %1865 = vmatpush1.bf16.msra.mxu0 %v1789
    %1866 = vmatprep.subr.bf16.mxu0 0
    %1867 = vmatpush1.bf16.msra.mxu0 %v1788
    %1868 = vmatprep.subr.bf16.mxu0 0
    %1869 = vmatpush2.bf16.msra.mxu0 %v1803
    %1870 = vmatprep.subr.bf16.mxu0 0
    %1871 = vmatpush2.bf16.msra.mxu0 %v1802
    %1872 = vmatprep.subr.bf16.mxu0 0
    %1873 = vmatpush2.bf16.msra.mxu0 %v1801
    %1874 = vmatprep.subr.bf16.mxu0 0
    %1875 = vmatpush2.bf16.msra.mxu0 %v1800
    %1876 = vmatprep.subr.bf16.mxu0 0
    %1877 = vmatpush2.bf16.msra.mxu0 %v1799
    %1878 = vmatprep.subr.bf16.mxu0 0
    %1879 = vmatpush2.bf16.msra.mxu0 %v1798
    %1880 = vmatprep.subr.bf16.mxu0 0
    %1881 = vmatpush2.bf16.msra.mxu0 %v1797
    %1882 = vmatprep.subr.bf16.mxu0 0
    %1883 = vmatpush2.bf16.msra.mxu0 %v1796
    %1884 = vmatprep.mubr.bf16.mxu0 %v1586
    %1885 = vmatmul.mubr.bf16.gmra.mxu0 %v1585
    %v1886 = vpop.f32.mrf.mxu0
    %v1887 = vadd.f32 %v1658, %v1886
    %v1888 = vpop.f32.mrf.mxu0
    %v1889 = vpop.f32.mrf.mxu0
    %v1890 = vadd.f32 %v1658, %v1889
    %v1891 = vpop.f32.mrf.mxu0
    %1892 = vdwg.mxu0
    %1893 = vmatprep.subr.bf16.mxu0 0
    %1894 = vmatpush1.bf16.msra.mxu0 %v1811
    %1895 = vmatprep.subr.bf16.mxu0 0
    %1896 = vmatpush1.bf16.msra.mxu0 %v1810
    %1897 = vmatprep.subr.bf16.mxu0 0
    %1898 = vmatpush1.bf16.msra.mxu0 %v1809
    %1899 = vmatprep.subr.bf16.mxu0 0
    %1900 = vmatpush1.bf16.msra.mxu0 %v1808
    %1901 = vmatprep.subr.bf16.mxu0 0
    %1902 = vmatpush1.bf16.msra.mxu0 %v1807
    %1903 = vmatprep.subr.bf16.mxu0 0
    %1904 = vmatpush1.bf16.msra.mxu0 %v1806
    %1905 = vmatprep.subr.bf16.mxu0 0
    %1906 = vmatpush1.bf16.msra.mxu0 %v1805
    %1907 = vmatprep.subr.bf16.mxu0 0
    %1908 = vmatpush1.bf16.msra.mxu0 %v1804
    %1909 = vmatprep.subr.bf16.mxu0 0
    %1910 = vmatpush2.bf16.msra.mxu0 %v1819
    %1911 = vmatprep.subr.bf16.mxu0 0
    %1912 = vmatpush2.bf16.msra.mxu0 %v1818
    %1913 = vmatprep.subr.bf16.mxu0 0
    %1914 = vmatpush2.bf16.msra.mxu0 %v1817
    %1915 = vmatprep.subr.bf16.mxu0 0
    %1916 = vmatpush2.bf16.msra.mxu0 %v1816
    %1917 = vmatprep.subr.bf16.mxu0 0
    %1918 = vmatpush2.bf16.msra.mxu0 %v1815
    %1919 = vmatprep.subr.bf16.mxu0 0
    %1920 = vmatpush2.bf16.msra.mxu0 %v1814
    %1921 = vmatprep.subr.bf16.mxu0 0
    %1922 = vmatpush2.bf16.msra.mxu0 %v1813
    %1923 = vmatprep.subr.bf16.mxu0 0
    %1924 = vmatpush2.bf16.msra.mxu0 %v1812
    %1925 = vmatprep.mubr.bf16.mxu0 %v1588
    %1926 = vmatmul.mubr.bf16.gmra.mxu0 %v1587
    %v1927 = vpop.f32.mrf.mxu0
    %v1928 = vadd.f32 %v1887, %v1927
    %v1929 = vpop.f32.mrf.mxu0
    %v1930 = vpop.f32.mrf.mxu0
    %v1931 = vadd.f32 %v1890, %v1930
    %v1932 = vpop.f32.mrf.mxu0
    %1933 = vdwg.mxu0
    %1934 = vst [vmem:[%s7] sm:$0xff] %v1928
    %1935 = vst [vmem:[%s7 + $0x8] sm:$0xff] %v1931
    // Predicated region
    $region54: #{neural_net_forward.1} parent=1 // pred_check
      _
    $region55: #{neural_net_forward.1} parent=1 // pred_check_branch
      %1937 = sbr.rel (0) target = $region57
    $region56: #{neural_net_forward.1} parent=1 // pred_region
      _
    $region57: #{neural_net_forward.1} parent=1 // pred_fallthru
      _
    // Predicated region
    $region58: #{neural_net_forward.1} parent=1 // pred_check
      _
    $region59: #{neural_net_forward.1} parent=1 // pred_check_branch
      %1939 = sbr.rel (0) target = $region61
    $region60: #{neural_net_forward.1} parent=1 // pred_region
      _
    $region61: #{neural_net_forward.1} parent=1 // pred_fallthru
      _
    %1940 = vsyncpa [#allocation3], 1
    %1941 = vsyncpa [#allocation5], 1
    %1942 = vsyncpa [#allocation8], 1
    %1943 = vsyncpa [#allocation11], 1

</llo_original>
